<compile_context>
chip_gen: v7x
topology: tpu7x:2x2x1
jax: 0.10.0
libtpu: 0.0.40
codegen_flags: <defaults>
</compile_context>

<pallas_src>
import functools

import jax
import jax.numpy as jnp
from jax.experimental import pallas as pl
from jax.experimental.pallas import tpu as pltpu

IN_FEATURES = 1024
OUT_FEATURES = 1024
ROW_BUCKET = 128          # pad total instance count to a multiple of this
DEFAULT_TN = 256          # 4 N-tiles: weight pass-once + DMA/compute overlap


def _linear_kernel(x_ref, w_ref, b_ref, o_ref):
    """One (M, tn) output slab: y = x @ W_t[:, j*tn:(j+1)*tn] + b[j*tn:(j+1)*tn]."""
    o_ref[...] = (
        jnp.dot(x_ref[...], w_ref[...], preferred_element_type=jnp.float32)
        + b_ref[...]
    ).astype(o_ref.dtype)


@functools.partial(jax.jit, static_argnames=("tn",))
def linear_pallas(x, w_t, b, *, tn=DEFAULT_TN):
    """y = x @ w_t + b  via a single-pass-over-K Pallas kernel.

    x   : [M, K]   (M multiple of 8; here bucketed to multiples of 128)
    w_t : [K, N]   transposed nn.Linear weight (bf16 recommended)
    b   : [1, N]   f32 bias
    out : [M, N]   f32
    """
    M, K = x.shape
    K2, N = w_t.shape
    assert K == K2 and b.shape == (1, N)
    assert M % 8 == 0 and K % 128 == 0 and N % tn == 0 and tn % 128 == 0

    grid = (N // tn,)
    return pl.pallas_call(
        _linear_kernel,
        out_shape=jax.ShapeDtypeStruct((M, N), jnp.float32),
        grid_spec=pltpu.PrefetchScalarGridSpec(
            num_scalar_prefetch=0,
            grid=grid,
            in_specs=[
                # Full-M, full-K activation block; constant index -> fetched once.
                pl.BlockSpec((M, K), lambda j: (0, 0)),
                # Weight slab streamed once over the N grid.
                pl.BlockSpec((K, tn), lambda j: (0, j)),
                # Bias slice for this N tile.
                pl.BlockSpec((1, tn), lambda j: (0, j)),
            ],
            out_specs=pl.BlockSpec((M, tn), lambda j: (0, j)),
        ),
        compiler_params=pltpu.CompilerParams(
            dimension_semantics=("parallel",),
        ),
    )(x, w_t, b)


class InstanceEncoder3Pallas:
    """JAX/Pallas re-implementation of InstanceEncoder3.forward."""

    def __init__(self, key, mask_on=False, instance_num=100,
                 param_dtype=jnp.bfloat16):
        self.mask_on = mask_on
        self.instance_num = instance_num
        self.compute_dtype = param_dtype

        k_w, k_b = jax.random.split(key)
        # Deterministic synthetic init with nn.Linear-shaped params.
        # PyTorch weight is [out, in]; store the transpose [in, out] for x @ Wt.
        bound = 1.0 / (IN_FEATURES ** 0.5)
        w = jax.random.uniform(
            k_w, (OUT_FEATURES, IN_FEATURES), jnp.float32, -bound, bound
        )
        self.w_t_f32 = jnp.transpose(w)                       # [in, out], f32 ref
        self.w_t = self.w_t_f32.astype(param_dtype)           # kernel operand
        self.b = jax.random.uniform(
            k_b, (1, OUT_FEATURES), jnp.float32, -bound, bound
        )

    def __call__(self, image_features, pred_instances,
                 pred_instance_box_features, training=True):
        losses = {}
        metrics = {}
        update_pred_instance_box_features = []
        if len(pred_instances) == 0:
            return (update_pred_instance_box_features, None, losses, metrics)

        # Batch every image's box features into one matrix so the 1024x1024
        # weight is loaded from HBM once for the whole forward pass.
        counts = [int(f.shape[0]) for f in pred_instance_box_features]
        x_all = (pred_instance_box_features[0] if len(counts) == 1
                 else jnp.concatenate(pred_instance_box_features, axis=0))
        m_total = x_all.shape[0]
        m_pad = max(ROW_BUCKET, ((m_total + ROW_BUCKET - 1) // ROW_BUCKET) * ROW_BUCKET)
        if m_pad != m_total:
            x_all = jnp.pad(x_all, ((0, m_pad - m_total), (0, 0)))
        x_all = x_all.astype(self.compute_dtype)

        y_all = linear_pallas(x_all, self.w_t, self.b, tn=DEFAULT_TN)

        off = 0
        for n in counts:
            update_pred_instance_box_features.append(y_all[off:off + n])
            off += n
        return (update_pred_instance_box_features, None, losses, metrics)


if __name__ == "__main__":
    key = jax.random.PRNGKey(0)
    k_params, k_x0, k_x1, k_img = jax.random.split(key, 4)

    encoder = InstanceEncoder3Pallas(k_params)

    # Two "images" with different numbers of predicted instances.
    box_feats = [
        jax.random.normal(k_x0, (8, IN_FEATURES), jnp.float32),
        jax.random.normal(k_x1, (13, IN_FEATURES), jnp.float32),
    ]
    pred_instances = [object(), object()]                     # metadata placeholders
    image_features = jax.random.normal(k_img, (2, 4, 16, 16), jnp.float32)  # unused

    outs, _, losses, metrics = encoder(
        image_features, pred_instances, box_feats, training=True
    )
    outs = [jax.block_until_ready(o) for o in outs]

    for x, y in zip(box_feats, outs):
        assert y.shape == (x.shape[0], OUT_FEATURES)
        # Exact-math reference (same bf16 operands, f32 accumulation): tight tol.
        ref_same = (
            jnp.dot(x.astype(encoder.compute_dtype), encoder.w_t,
                    preferred_element_type=jnp.float32)
            + encoder.b
        )
        assert jnp.allclose(y, ref_same, atol=1e-3, rtol=1e-3)
        # Full-precision nn.Linear reference: loose tol for the bf16 weight/act cast.
        ref_f32 = x @ encoder.w_t_f32 + encoder.b
        assert jnp.allclose(y, ref_f32, atol=2e-2, rtol=2e-2)

    print("KERNEL_OK")
</pallas_src>

<mosaic_0001>
module attributes {stable_mosaic.version = 11 : i64} {
  func.func @_linear_kernel(%arg0: i32, %arg1: memref<128x1024xbf16, #tpu.memory_space<vmem>>, %arg2: memref<1024x256xbf16, #tpu.memory_space<vmem>>, %arg3: memref<1x256xf32, #tpu.memory_space<vmem>>, %arg4: memref<128x256xf32, #tpu.memory_space<vmem>>) attributes {dimension_semantics = [#tpu.dimension_semantics<parallel>], iteration_bounds = array<i64: 4>, scalar_prefetch = 0 : i64, scratch_operands = 0 : i64, tpu.core_type = #tpu.core_type<tc>, window_params = [{pipeline_mode = #tpu.pipeline_mode<synchronous>, transform_indices = @transform_0, window_bounds = array<i64: 128, 1024>}, {transform_indices = @transform_1, window_bounds = array<i64: 1024, 256>}, {transform_indices = @transform_2, window_bounds = array<i64: 1, 256>}, {transform_indices = @transform_3, window_bounds = array<i64: 128, 256>}]} {
    %c0 = arith.constant 0 : index
    %c0_0 = arith.constant 0 : index
    %0 = vector.load %arg1[%c0, %c0_0] : memref<128x1024xbf16, #tpu.memory_space<vmem>>, vector<128x1024xbf16>
    %c0_1 = arith.constant 0 : index
    %c0_2 = arith.constant 0 : index
    %1 = vector.load %arg2[%c0_1, %c0_2] : memref<1024x256xbf16, #tpu.memory_space<vmem>>, vector<1024x256xbf16>
    %cst = arith.constant dense<0.000000e+00> : vector<128x256xf32>
    %2 = tpu.matmul %0, %1, %cst {dimension_numbers = #tpu.dot_dimension_numbers<[1], [0], [0], [1], [0, 0, 1, 1], [], []>} : vector<128x1024xbf16>, vector<1024x256xbf16>, vector<128x256xf32> -> vector<128x256xf32>
    %c0_3 = arith.constant 0 : index
    %c0_4 = arith.constant 0 : index
    %3 = vector.load %arg3[%c0_3, %c0_4] : memref<1x256xf32, #tpu.memory_space<vmem>>, vector<1x256xf32>
    %4 = vector.broadcast %3 : vector<1x256xf32> to vector<128x256xf32>
    %5 = arith.addf %2, %4 : vector<128x256xf32>
    %c0_5 = arith.constant 0 : index
    %c0_6 = arith.constant 0 : index
    %6 = vector.load %arg4[%c0_5, %c0_6] : memref<128x256xf32, #tpu.memory_space<vmem>>, vector<128x256xf32>
    tpu.vector_store %arg4[%c0_5, %c0_6], %5 {strides = array<i32>} : memref<128x256xf32, #tpu.memory_space<vmem>>, vector<128x256xf32>,
    return
  }
  func.func @transform_0(%arg0: i32) -> (i32, i32) {
    %c0_i32 = arith.constant 0 : i32
    %c0_i32_0 = arith.constant 0 : i32
    %c0_i32_1 = arith.constant 0 : i32
    return %c0_i32, %c0_i32_0 : i32, i32
  }
  func.func @transform_1(%arg0: i32) -> (i32, i32) {
    %c0_i32 = arith.constant 0 : i32
    %c0_i32_0 = arith.constant 0 : i32
    return %c0_i32, %arg0 : i32, i32
  }
  func.func @transform_2(%arg0: i32) -> (i32, i32) {
    %c0_i32 = arith.constant 0 : i32
    %c0_i32_0 = arith.constant 0 : i32
    return %c0_i32, %arg0 : i32, i32
  }
  func.func @transform_3(%arg0: i32) -> (i32, i32) {
    %c0_i32 = arith.constant 0 : i32
    %c0_i32_0 = arith.constant 0 : i32
    return %c0_i32, %arg0 : i32, i32
  }
}

</mosaic_0001>

<llo_original>
// kernel: linear_pallas.1
$region0: #{linear_pallas.1}
  #allocation0 [shape = 'u32[]', space=smem, size = 0x4, offset = 0x4, fixed_abs, tag = 'smem constant byte address 0x4 - core index']
  #allocation1 [shape = 'u32[144,128]{1,0:T(1,128)}', space=vmem, size = 0x12000, scoped, tag = 'internal scratch']
  %s0 = inlined_call_operand.hbm [shape: bf16[128,1024], index: 0, kind: input, shape index: {}]
  %s1 = inlined_call_operand.hbm [shape: bf16[1024,1024], index: 1, kind: input, shape index: {}]
  %s2 = inlined_call_operand.hbm [shape: f32[1,1024], index: 2, kind: input, shape index: {}]
  %s3 = inlined_call_operand.hbm [shape: f32[128,1024], index: 3, kind: output, shape index: {}]
  %s4 = sld [smem:[#allocation0]]
  $region57: #{linear_pallas.1} parent=0
    _
  %s6 = ssub.s32 1, %s4
  %s7 = scalar_select 0, %s6, %s4
  $region1: #{linear_pallas.1} parent=0
    #allocation2 [shape = 'u8[262144]{0}', space=vmem, size = 0x40000, scoped, tag = 'input window, operand 0, single buffered']
    #allocation3 [shape = 's32[2]{0}', space=sflag, size = 0x8, scoped, tag = 'scoped memory for linear_pallas.1']
    #allocation4 [shape = 's32[2]{0}', space=sflag, size = 0x8, scoped, tag = 'scoped memory for linear_pallas.1']
    #allocation5 [shape = 'u8[1048576]{0}', space=vmem, size = 0x100000, scoped, tag = 'input window, operand 1']
    #allocation6 [shape = 's32[2]{0}', space=sflag, size = 0x8, scoped, tag = 'scoped memory for linear_pallas.1']
    #allocation7 [shape = 'u8[2048]{0}', space=vmem, size = 0x800, scoped, tag = 'input window, operand 2']
    #allocation8 [shape = 'u8[262144]{0}', space=vmem, size = 0x40000, scoped, tag = 'output window, operand 0']
    %8 = vsyncpa [#allocation3], 0
    %9 = vsyncpa [#allocation6], 0
    %s10 = scalar_lea.sflag [#allocation6], 1
    %11 = vsyncpa %s10, 0
    %12 = vsyncpa [#allocation4], 0
    %s13 = scalar_lea.sflag [#allocation4], 1
    %14 = vsyncpa %s13, 0
    loop: start=0, step=1, limit=6
    $region2: #{linear_pallas.1} parent=1 // loop_pre_header
      _
    $region3: #{linear_pallas.1} parent=1 // loop_header
      %s16 = sphi 0, %s20
      %p17 = scmp.ge.s32.totalorder %s16, 6
      %s24 = sphi 0, %s24
      %s26 = sphi 0, %s24
      %s27 = sphi 0, %s26
      %s41 = sphi 0, %s27
      %s47 = sphi 0, %s49
      %s50 = sphi 0, %s47
      %s51 = sphi 0, %s50
      %s67 = sphi 0, %s51
      %s73 = sphi 0, %s75
      %s76 = sphi 0, %s73
      %s77 = sphi 0, %s76
      %s93 = sphi 0, %s77
      %s99 = sphi 0, %s101
      %s102 = sphi 0, %s99
      %s103 = sphi 0, %s102
      %s119 = sphi 0, %s103
    $region4: #{linear_pallas.1} parent=1 // loop_header_branch
      %19 = sbr.rel (%p17) target = $region8
    $region5: #{linear_pallas.1} parent=1 // loop_body
      %s21 = ssub.s32 %s16, 1
      %s22 = ssub.s32 %s16, 2
      %s23 = sadd.s32 %s16, 1
      %s25 = sadd.s32 %s24, 1
      %p28 = scmp.eq.s32.totalorder %s16, 3
      %p29 = scmp.ne.s32.totalorder %s24, %s26
      %p30 = scmp.eq.s32.totalorder %s16, 0
      %p31 = por %p29, %p30
      %p32 = scmp.ne.s32.totalorder %s24, %s26
      %p33 = scmp.eq.s32.totalorder %s21, 3
      %p34 = por %p32, %p33
      %p35 = scmp.ne.s32.totalorder %s26, %s27
      %p36 = scmp.eq.s32.totalorder %s21, 0
      %p37 = por %p35, %p36
      %p38 = scmp.ne.s32.totalorder %s26, %s27
      %p39 = scmp.eq.s32.totalorder %s22, 3
      %p40 = por %p38, %p39
      %p42 = scmp.ne.s32.totalorder %s27, %s41
      %p43 = scmp.eq.s32.totalorder %s22, 0
      %p44 = por %p42, %p43
      %s45 = ssub.s32 %s16, %s23
      %p46 = scmp.eq.s32.totalorder %s45, 0
      %s48 = sadd.s32 %s47, 1
      %s49 = scalar_select %p46, %s47, %s48
      %p52 = pneg %p46
      %p53 = scmp.eq.s32.totalorder %s16, 3
      %p54 = por %p52, %p53
      %p55 = scmp.ne.s32.totalorder %s47, %s50
      %p56 = scmp.eq.s32.totalorder %s16, 0
      %p57 = por %p55, %p56
      %p58 = scmp.ne.s32.totalorder %s47, %s50
      %p59 = scmp.eq.s32.totalorder %s21, 3
      %p60 = por %p58, %p59
      %p61 = scmp.ne.s32.totalorder %s50, %s51
      %p62 = scmp.eq.s32.totalorder %s21, 0
      %p63 = por %p61, %p62
      %p64 = scmp.ne.s32.totalorder %s50, %s51
      %p65 = scmp.eq.s32.totalorder %s22, 3
      %p66 = por %p64, %p65
      %p68 = scmp.ne.s32.totalorder %s51, %s67
      %p69 = scmp.eq.s32.totalorder %s22, 0
      %p70 = por %p68, %p69
      %s71 = ssub.s32 %s16, %s23
      %p72 = scmp.eq.s32.totalorder %s71, 0
      %s74 = sadd.s32 %s73, 1
      %s75 = scalar_select %p72, %s73, %s74
      %p78 = pneg %p72
      %p79 = scmp.eq.s32.totalorder %s16, 3
      %p80 = por %p78, %p79
      %p81 = scmp.ne.s32.totalorder %s73, %s76
      %p82 = scmp.eq.s32.totalorder %s16, 0
      %p83 = por %p81, %p82
      %p84 = scmp.ne.s32.totalorder %s73, %s76
      %p85 = scmp.eq.s32.totalorder %s21, 3
      %p86 = por %p84, %p85
      %p87 = scmp.ne.s32.totalorder %s76, %s77
      %p88 = scmp.eq.s32.totalorder %s21, 0
      %p89 = por %p87, %p88
      %p90 = scmp.ne.s32.totalorder %s76, %s77
      %p91 = scmp.eq.s32.totalorder %s22, 3
      %p92 = por %p90, %p91
      %p94 = scmp.ne.s32.totalorder %s77, %s93
      %p95 = scmp.eq.s32.totalorder %s22, 0
      %p96 = por %p94, %p95
      %s97 = ssub.s32 %s16, %s23
      %p98 = scmp.eq.s32.totalorder %s97, 0
      %s100 = sadd.s32 %s99, 1
      %s101 = scalar_select %p98, %s99, %s100
      %p104 = pneg %p98
      %p105 = scmp.eq.s32.totalorder %s16, 3
      %p106 = por %p104, %p105
      %p107 = scmp.ne.s32.totalorder %s99, %s102
      %p108 = scmp.eq.s32.totalorder %s16, 0
      %p109 = por %p107, %p108
      %p110 = scmp.ne.s32.totalorder %s99, %s102
      %p111 = scmp.eq.s32.totalorder %s21, 3
      %p112 = por %p110, %p111
      %p113 = scmp.ne.s32.totalorder %s102, %s103
      %p114 = scmp.eq.s32.totalorder %s21, 0
      %p115 = por %p113, %p114
      %p116 = scmp.ne.s32.totalorder %s102, %s103
      %p117 = scmp.eq.s32.totalorder %s22, 3
      %p118 = por %p116, %p117
      %p120 = scmp.ne.s32.totalorder %s103, %s119
      %p121 = scmp.eq.s32.totalorder %s22, 0
      %p122 = por %p120, %p121
      %p123 = scmp.le.s32.totalorder 1, %s16
      %p124 = scmp.lt.s32.totalorder %s16, 5
      %p125 = pnand %p123, %p124
      %p126 = pneg %p125
      // Predicated region
      $region9: #{linear_pallas.1} parent=5 // pred_check
        _
      $region10: #{linear_pallas.1} parent=5 // pred_check_branch
        %128 = sbr.rel (%p125) target = $region12
      $region11: #{linear_pallas.1} parent=5 // pred_region
        %s129 = ssub.s32 %s16, 1
        // Predicated region
        $region13: #{linear_pallas.1} parent=11 // pred_check
          %p130 = pneg %p37
        $region14: #{linear_pallas.1} parent=11 // pred_check_branch
          %132 = sbr.rel (%p130) target = $region16
        $region15: #{linear_pallas.1} parent=11 // pred_region
          %s134 = ssub.s32 8192, 8192
          %135 = vsyncadd [#allocation3], %s134
          %s136 = sshll.u32 [#allocation2], 4
          %s137 = int_to_ptr.vmem [resolvable:$true] %s136
          %142 = dma.hbm_to_vmem [thread:$0]  %s0, 8192, %s137, [#allocation3], 512, 512, 32
        $region16: #{linear_pallas.1} parent=11 // pred_fallthru
          _
      $region12: #{linear_pallas.1} parent=5 // pred_fallthru
        _
      %p143 = scmp.lt.s32.totalorder %s16, 4
      // Predicated region
      $region17: #{linear_pallas.1} parent=5 // pred_check
        %p144 = pneg %p143
      $region18: #{linear_pallas.1} parent=5 // pred_check_branch
        %146 = sbr.rel (%p144) target = $region20
      $region19: #{linear_pallas.1} parent=5 // pred_region
        // Predicated region
        $region21: #{linear_pallas.1} parent=19 // pred_check
          %p147 = pneg %p57
        $region22: #{linear_pallas.1} parent=19 // pred_check_branch
          %149 = sbr.rel (%p147) target = $region24
        $region23: #{linear_pallas.1} parent=19 // pred_region
          %s150 = sand.u32 %s16, 1
          %s151 = scalar_lea.sflag [#allocation6], %s150
          %s152 = sand.u32 %s47, 1
          %s153 = smul.addr %s152, 1024
          %s154 = scalar_lea.vmem [#allocation5], %s153
          %s155 = smul.u32 2, %s16
          %s157 = ssub.s32 16384, 16384
          %158 = vsyncadd %s151, %s157
          %s159 = smul.addr %s155, 64
          %s160 = scalar_lea.hbm %s1, %s159
          %s161 = sshll.u32 %s154, 4
          %s162 = int_to_ptr.vmem [resolvable:$true] %s161
          %167 = dma.hbm_to_vmem [thread:$0]  %s160, 16384, %s162, %s151, 512, 128, 8
        $region24: #{linear_pallas.1} parent=19 // pred_fallthru
          _
        // Predicated region
        $region25: #{linear_pallas.1} parent=19 // pred_check
          %p168 = pneg %p83
        $region26: #{linear_pallas.1} parent=19 // pred_check_branch
          %170 = sbr.rel (%p168) target = $region28
        $region27: #{linear_pallas.1} parent=19 // pred_region
          %s171 = sand.u32 %s16, 1
          %s172 = scalar_lea.sflag [#allocation6], %s171
          %s173 = sand.u32 %s73, 1
          %s174 = smul.addr %s173, 2
          %s175 = scalar_lea.vmem [#allocation7], %s174
          %s176 = smul.u32 2, %s16
          %s178 = ssub.s32 32, 32
          %179 = vsyncadd %s172, %s178
          %s180 = smul.addr %s176, 16
          %s181 = scalar_lea.hbm %s2, %s180
          %s183 = sshll.u32 %s175, 4
          %s184 = int_to_ptr.vmem [resolvable:$true] %s183
          %186 = dma.hbm_to_vmem [thread:$0]  %s181, 32, %s184, %s172
        $region28: #{linear_pallas.1} parent=19 // pred_fallthru
          _
      $region20: #{linear_pallas.1} parent=5 // pred_fallthru
        _
      %p187 = scmp.le.s32.totalorder 1, %s16
      %p188 = scmp.lt.s32.totalorder %s16, 5
      %p189 = pnand %p187, %p188
      %p190 = pneg %p189
      // Predicated region
      $region29: #{linear_pallas.1} parent=5 // pred_check
        _
      $region30: #{linear_pallas.1} parent=5 // pred_check_branch
        %192 = sbr.rel (%p189) target = $region32
      $region31: #{linear_pallas.1} parent=5 // pred_region
        %s193 = ssub.s32 %s16, 1
        // Predicated region
        $region33: #{linear_pallas.1} parent=31 // pred_check
          %p194 = pneg %p37
        $region34: #{linear_pallas.1} parent=31 // pred_check_branch
          %196 = sbr.rel (%p194) target = $region36
        $region35: #{linear_pallas.1} parent=31 // pred_region
          %197 = dma.done [#allocation3], 8192
        $region36: #{linear_pallas.1} parent=31 // pred_fallthru
          _
        %s198 = sand.u32 %s21, 1
        %s199 = scalar_lea.sflag [#allocation6], %s198
        %s200 = sand.u32 %s50, 1
        %s201 = smul.addr %s200, 1024
        %s202 = scalar_lea.vmem [#allocation5], %s201
        // Predicated region
        $region37: #{linear_pallas.1} parent=31 // pred_check
          %p203 = pneg %p63
        $region38: #{linear_pallas.1} parent=31 // pred_check_branch
          %205 = sbr.rel (%p203) target = $region40
        $region39: #{linear_pallas.1} parent=31 // pred_region
          %206 = dma.done %s199, 16384
        $region40: #{linear_pallas.1} parent=31 // pred_fallthru
          _
        %s207 = sand.u32 %s21, 1
        %s208 = scalar_lea.sflag [#allocation6], %s207
        %s209 = sand.u32 %s76, 1
        %s210 = smul.addr %s209, 2
        %s211 = scalar_lea.vmem [#allocation7], %s210
        // Predicated region
        $region41: #{linear_pallas.1} parent=31 // pred_check
          %p212 = pneg %p89
        $region42: #{linear_pallas.1} parent=31 // pred_check_branch
          %214 = sbr.rel (%p212) target = $region44
        $region43: #{linear_pallas.1} parent=31 // pred_region
          %215 = dma.done %s208, 32
        $region44: #{linear_pallas.1} parent=31 // pred_fallthru
          _
        %p216 = pneg %p37
        %p217 = pneg %p34
        %s218 = sand.u32 %s21, 1
        %s219 = scalar_lea.sflag [#allocation6], %s218
        %s220 = sand.u32 %s50, 1
        %s221 = smul.addr %s220, 1024
        %s222 = scalar_lea.vmem [#allocation5], %s221
        %p223 = pneg %p63
        %p224 = pneg %p60
        %s225 = sand.u32 %s21, 1
        %s226 = scalar_lea.sflag [#allocation6], %s225
        %s227 = sand.u32 %s76, 1
        %s228 = smul.addr %s227, 2
        %s229 = scalar_lea.vmem [#allocation7], %s228
        %p230 = pneg %p89
        %p231 = pneg %p86
        %p232 = pneg %p115
        %p233 = pneg %p112
        %s234 = sand.u32 %s102, 1
        %s235 = scalar_lea.sflag [#allocation4], %s234
        %s236 = sand.u32 %s102, 1
        %s237 = smul.addr %s236, 256
        %s238 = scalar_lea.vmem [#allocation8], %s237
        %s239 = smul.u32 2, %s21
        %s240 = smul.u32 2, %s21
        %s241 = smul.u32 2, %s21
        %v242 = vld [vmem:[#allocation2] sm:$0xff]
        %v243 = vld [vmem:[#allocation2 + $0x8] sm:$0xff]
        %v244 = vld [vmem:[#allocation2 + $0x10] sm:$0xff]
        %v245 = vld [vmem:[#allocation2 + $0x18] sm:$0xff]
        %v246 = vld [vmem:[#allocation2 + $0x20] sm:$0xff]
        %v247 = vld [vmem:[#allocation2 + $0x28] sm:$0xff]
        %v248 = vld [vmem:[#allocation2 + $0x30] sm:$0xff]
        %v249 = vld [vmem:[#allocation2 + $0x38] sm:$0xff]
        %v250 = vld [vmem:[#allocation2 + $0x40] sm:$0xff]
        %v251 = vld [vmem:[#allocation2 + $0x48] sm:$0xff]
        %v252 = vld [vmem:[#allocation2 + $0x50] sm:$0xff]
        %v253 = vld [vmem:[#allocation2 + $0x58] sm:$0xff]
        %v254 = vld [vmem:[#allocation2 + $0x60] sm:$0xff]
        %v255 = vld [vmem:[#allocation2 + $0x68] sm:$0xff]
        %v256 = vld [vmem:[#allocation2 + $0x70] sm:$0xff]
        %v257 = vld [vmem:[#allocation2 + $0x78] sm:$0xff]
        %v258 = vld [vmem:[#allocation2 + $0x80] sm:$0xff]
        %v259 = vld [vmem:[#allocation2 + $0x88] sm:$0xff]
        %v260 = vld [vmem:[#allocation2 + $0x90] sm:$0xff]
        %v261 = vld [vmem:[#allocation2 + $0x98] sm:$0xff]
        %v262 = vld [vmem:[#allocation2 + $0xa0] sm:$0xff]
        %v263 = vld [vmem:[#allocation2 + $0xa8] sm:$0xff]
        %v264 = vld [vmem:[#allocation2 + $0xb0] sm:$0xff]
        %v265 = vld [vmem:[#allocation2 + $0xb8] sm:$0xff]
        %v266 = vld [vmem:[#allocation2 + $0xc0] sm:$0xff]
        %v267 = vld [vmem:[#allocation2 + $0xc8] sm:$0xff]
        %v268 = vld [vmem:[#allocation2 + $0xd0] sm:$0xff]
        %v269 = vld [vmem:[#allocation2 + $0xd8] sm:$0xff]
        %v270 = vld [vmem:[#allocation2 + $0xe0] sm:$0xff]
        %v271 = vld [vmem:[#allocation2 + $0xe8] sm:$0xff]
        %v272 = vld [vmem:[#allocation2 + $0xf0] sm:$0xff]
        %v273 = vld [vmem:[#allocation2 + $0xf8] sm:$0xff]
        %v274 = vld [vmem:[#allocation2 + $0x100] sm:$0xff]
        %v275 = vld [vmem:[#allocation2 + $0x108] sm:$0xff]
        %v276 = vld [vmem:[#allocation2 + $0x110] sm:$0xff]
        %v277 = vld [vmem:[#allocation2 + $0x118] sm:$0xff]
        %v278 = vld [vmem:[#allocation2 + $0x120] sm:$0xff]
        %v279 = vld [vmem:[#allocation2 + $0x128] sm:$0xff]
        %v280 = vld [vmem:[#allocation2 + $0x130] sm:$0xff]
        %v281 = vld [vmem:[#allocation2 + $0x138] sm:$0xff]
        %v282 = vld [vmem:[#allocation2 + $0x140] sm:$0xff]
        %v283 = vld [vmem:[#allocation2 + $0x148] sm:$0xff]
        %v284 = vld [vmem:[#allocation2 + $0x150] sm:$0xff]
        %v285 = vld [vmem:[#allocation2 + $0x158] sm:$0xff]
        %v286 = vld [vmem:[#allocation2 + $0x160] sm:$0xff]
        %v287 = vld [vmem:[#allocation2 + $0x168] sm:$0xff]
        %v288 = vld [vmem:[#allocation2 + $0x170] sm:$0xff]
        %v289 = vld [vmem:[#allocation2 + $0x178] sm:$0xff]
        %v290 = vld [vmem:[#allocation2 + $0x180] sm:$0xff]
        %v291 = vld [vmem:[#allocation2 + $0x188] sm:$0xff]
        %v292 = vld [vmem:[#allocation2 + $0x190] sm:$0xff]
        %v293 = vld [vmem:[#allocation2 + $0x198] sm:$0xff]
        %v294 = vld [vmem:[#allocation2 + $0x1a0] sm:$0xff]
        %v295 = vld [vmem:[#allocation2 + $0x1a8] sm:$0xff]
        %v296 = vld [vmem:[#allocation2 + $0x1b0] sm:$0xff]
        %v297 = vld [vmem:[#allocation2 + $0x1b8] sm:$0xff]
        %v298 = vld [vmem:[#allocation2 + $0x1c0] sm:$0xff]
        %v299 = vld [vmem:[#allocation2 + $0x1c8] sm:$0xff]
        %v300 = vld [vmem:[#allocation2 + $0x1d0] sm:$0xff]
        %v301 = vld [vmem:[#allocation2 + $0x1d8] sm:$0xff]
        %v302 = vld [vmem:[#allocation2 + $0x1e0] sm:$0xff]
        %v303 = vld [vmem:[#allocation2 + $0x1e8] sm:$0xff]
        %v304 = vld [vmem:[#allocation2 + $0x1f0] sm:$0xff]
        %v305 = vld [vmem:[#allocation2 + $0x1f8] sm:$0xff]
        %v306 = vld [vmem:[%s202] sm:$0xff]
        %v307 = vld [vmem:[%s202 + $0x8] sm:$0xff]
        %v308 = vld [vmem:[%s202 + $0x10] sm:$0xff]
        %v309 = vld [vmem:[%s202 + $0x18] sm:$0xff]
        %v310 = vld [vmem:[%s202 + $0x20] sm:$0xff]
        %v311 = vld [vmem:[%s202 + $0x28] sm:$0xff]
        %v312 = vld [vmem:[%s202 + $0x30] sm:$0xff]
        %v313 = vld [vmem:[%s202 + $0x38] sm:$0xff]
        %v314 = vld [vmem:[%s202 + $0x40] sm:$0xff]
        %v315 = vld [vmem:[%s202 + $0x48] sm:$0xff]
        %v316 = vld [vmem:[%s202 + $0x50] sm:$0xff]
        %v317 = vld [vmem:[%s202 + $0x58] sm:$0xff]
        %v318 = vld [vmem:[%s202 + $0x60] sm:$0xff]
        %v319 = vld [vmem:[%s202 + $0x68] sm:$0xff]
        %v320 = vld [vmem:[%s202 + $0x70] sm:$0xff]
        %v321 = vld [vmem:[%s202 + $0x78] sm:$0xff]
        %v322 = vld [vmem:[%s202 + $0x80] sm:$0xff]
        %v323 = vld [vmem:[%s202 + $0x88] sm:$0xff]
        %v324 = vld [vmem:[%s202 + $0x90] sm:$0xff]
        %v325 = vld [vmem:[%s202 + $0x98] sm:$0xff]
        %v326 = vld [vmem:[%s202 + $0xa0] sm:$0xff]
        %v327 = vld [vmem:[%s202 + $0xa8] sm:$0xff]
        %v328 = vld [vmem:[%s202 + $0xb0] sm:$0xff]
        %v329 = vld [vmem:[%s202 + $0xb8] sm:$0xff]
        %v330 = vld [vmem:[%s202 + $0xc0] sm:$0xff]
        %v331 = vld [vmem:[%s202 + $0xc8] sm:$0xff]
        %v332 = vld [vmem:[%s202 + $0xd0] sm:$0xff]
        %v333 = vld [vmem:[%s202 + $0xd8] sm:$0xff]
        %v334 = vld [vmem:[%s202 + $0xe0] sm:$0xff]
        %v335 = vld [vmem:[%s202 + $0xe8] sm:$0xff]
        %v336 = vld [vmem:[%s202 + $0xf0] sm:$0xff]
        %v337 = vld [vmem:[%s202 + $0xf8] sm:$0xff]
        %v338 = vld [vmem:[%s202 + $0x100] sm:$0xff]
        %v339 = vld [vmem:[%s202 + $0x108] sm:$0xff]
        %v340 = vld [vmem:[%s202 + $0x110] sm:$0xff]
        %v341 = vld [vmem:[%s202 + $0x118] sm:$0xff]
        %v342 = vld [vmem:[%s202 + $0x120] sm:$0xff]
        %v343 = vld [vmem:[%s202 + $0x128] sm:$0xff]
        %v344 = vld [vmem:[%s202 + $0x130] sm:$0xff]
        %v345 = vld [vmem:[%s202 + $0x138] sm:$0xff]
        %v346 = vld [vmem:[%s202 + $0x140] sm:$0xff]
        %v347 = vld [vmem:[%s202 + $0x148] sm:$0xff]
        %v348 = vld [vmem:[%s202 + $0x150] sm:$0xff]
        %v349 = vld [vmem:[%s202 + $0x158] sm:$0xff]
        %v350 = vld [vmem:[%s202 + $0x160] sm:$0xff]
        %v351 = vld [vmem:[%s202 + $0x168] sm:$0xff]
        %v352 = vld [vmem:[%s202 + $0x170] sm:$0xff]
        %v353 = vld [vmem:[%s202 + $0x178] sm:$0xff]
        %v354 = vld [vmem:[%s202 + $0x180] sm:$0xff]
        %v355 = vld [vmem:[%s202 + $0x188] sm:$0xff]
        %v356 = vld [vmem:[%s202 + $0x190] sm:$0xff]
        %v357 = vld [vmem:[%s202 + $0x198] sm:$0xff]
        %v358 = vld [vmem:[%s202 + $0x1a0] sm:$0xff]
        %v359 = vld [vmem:[%s202 + $0x1a8] sm:$0xff]
        %v360 = vld [vmem:[%s202 + $0x1b0] sm:$0xff]
        %v361 = vld [vmem:[%s202 + $0x1b8] sm:$0xff]
        %v362 = vld [vmem:[%s202 + $0x1c0] sm:$0xff]
        %v363 = vld [vmem:[%s202 + $0x1c8] sm:$0xff]
        %v364 = vld [vmem:[%s202 + $0x1d0] sm:$0xff]
        %v365 = vld [vmem:[%s202 + $0x1d8] sm:$0xff]
        %v366 = vld [vmem:[%s202 + $0x1e0] sm:$0xff]
        %v367 = vld [vmem:[%s202 + $0x1e8] sm:$0xff]
        %v368 = vld [vmem:[%s202 + $0x1f0] sm:$0xff]
        %v369 = vld [vmem:[%s202 + $0x1f8] sm:$0xff]
        %v370 = vld [vmem:[%s202 + $0x200] sm:$0xff]
        %v371 = vld [vmem:[%s202 + $0x208] sm:$0xff]
        %v372 = vld [vmem:[%s202 + $0x210] sm:$0xff]
        %v373 = vld [vmem:[%s202 + $0x218] sm:$0xff]
        %v374 = vld [vmem:[%s202 + $0x220] sm:$0xff]
        %v375 = vld [vmem:[%s202 + $0x228] sm:$0xff]
        %v376 = vld [vmem:[%s202 + $0x230] sm:$0xff]
        %v377 = vld [vmem:[%s202 + $0x238] sm:$0xff]
        %v378 = vld [vmem:[%s202 + $0x240] sm:$0xff]
        %v379 = vld [vmem:[%s202 + $0x248] sm:$0xff]
        %v380 = vld [vmem:[%s202 + $0x250] sm:$0xff]
        %v381 = vld [vmem:[%s202 + $0x258] sm:$0xff]
        %v382 = vld [vmem:[%s202 + $0x260] sm:$0xff]
        %v383 = vld [vmem:[%s202 + $0x268] sm:$0xff]
        %v384 = vld [vmem:[%s202 + $0x270] sm:$0xff]
        %v385 = vld [vmem:[%s202 + $0x278] sm:$0xff]
        %v386 = vld [vmem:[%s202 + $0x280] sm:$0xff]
        %v387 = vld [vmem:[%s202 + $0x288] sm:$0xff]
        %v388 = vld [vmem:[%s202 + $0x290] sm:$0xff]
        %v389 = vld [vmem:[%s202 + $0x298] sm:$0xff]
        %v390 = vld [vmem:[%s202 + $0x2a0] sm:$0xff]
        %v391 = vld [vmem:[%s202 + $0x2a8] sm:$0xff]
        %v392 = vld [vmem:[%s202 + $0x2b0] sm:$0xff]
        %v393 = vld [vmem:[%s202 + $0x2b8] sm:$0xff]
        %v394 = vld [vmem:[%s202 + $0x2c0] sm:$0xff]
        %v395 = vld [vmem:[%s202 + $0x2c8] sm:$0xff]
        %v396 = vld [vmem:[%s202 + $0x2d0] sm:$0xff]
        %v397 = vld [vmem:[%s202 + $0x2d8] sm:$0xff]
        %v398 = vld [vmem:[%s202 + $0x2e0] sm:$0xff]
        %v399 = vld [vmem:[%s202 + $0x2e8] sm:$0xff]
        %v400 = vld [vmem:[%s202 + $0x2f0] sm:$0xff]
        %v401 = vld [vmem:[%s202 + $0x2f8] sm:$0xff]
        %v402 = vld [vmem:[%s202 + $0x300] sm:$0xff]
        %v403 = vld [vmem:[%s202 + $0x308] sm:$0xff]
        %v404 = vld [vmem:[%s202 + $0x310] sm:$0xff]
        %v405 = vld [vmem:[%s202 + $0x318] sm:$0xff]
        %v406 = vld [vmem:[%s202 + $0x320] sm:$0xff]
        %v407 = vld [vmem:[%s202 + $0x328] sm:$0xff]
        %v408 = vld [vmem:[%s202 + $0x330] sm:$0xff]
        %v409 = vld [vmem:[%s202 + $0x338] sm:$0xff]
        %v410 = vld [vmem:[%s202 + $0x340] sm:$0xff]
        %v411 = vld [vmem:[%s202 + $0x348] sm:$0xff]
        %v412 = vld [vmem:[%s202 + $0x350] sm:$0xff]
        %v413 = vld [vmem:[%s202 + $0x358] sm:$0xff]
        %v414 = vld [vmem:[%s202 + $0x360] sm:$0xff]
        %v415 = vld [vmem:[%s202 + $0x368] sm:$0xff]
        %v416 = vld [vmem:[%s202 + $0x370] sm:$0xff]
        %v417 = vld [vmem:[%s202 + $0x378] sm:$0xff]
        %v418 = vld [vmem:[%s202 + $0x380] sm:$0xff]
        %v419 = vld [vmem:[%s202 + $0x388] sm:$0xff]
        %v420 = vld [vmem:[%s202 + $0x390] sm:$0xff]
        %v421 = vld [vmem:[%s202 + $0x398] sm:$0xff]
        %v422 = vld [vmem:[%s202 + $0x3a0] sm:$0xff]
        %v423 = vld [vmem:[%s202 + $0x3a8] sm:$0xff]
        %v424 = vld [vmem:[%s202 + $0x3b0] sm:$0xff]
        %v425 = vld [vmem:[%s202 + $0x3b8] sm:$0xff]
        %v426 = vld [vmem:[%s202 + $0x3c0] sm:$0xff]
        %v427 = vld [vmem:[%s202 + $0x3c8] sm:$0xff]
        %v428 = vld [vmem:[%s202 + $0x3d0] sm:$0xff]
        %v429 = vld [vmem:[%s202 + $0x3d8] sm:$0xff]
        %v430 = vld [vmem:[%s202 + $0x3e0] sm:$0xff]
        %v431 = vld [vmem:[%s202 + $0x3e8] sm:$0xff]
        %v432 = vld [vmem:[%s202 + $0x3f0] sm:$0xff]
        %v433 = vld [vmem:[%s202 + $0x3f8] sm:$0xff]
        %v434 = vld [vmem:[%s211] sm:$0x3]
        %v436 = vlaneseq
        %v437 = vshrl.u32 %v436, 7
        %v438 = vsub.s32 0, %v437
        %v439 = vrot.slane %v434, %v438
        %v440 = vlaneseq
        %v441 = vshrl.u32 %v440, 7
        %v442 = vsub.s32 1, %v441
        %v443 = vrot.slane %v434, %v442
        %v510 = vunpack.c.l.b16 %v242
        %v511 = vunpack.c.h.b16 %v242
        %v512 = vunpack.c.l.b16 %v243
        %v513 = vunpack.c.h.b16 %v243
        %v514 = vunpack.c.l.b16 %v244
        %v515 = vunpack.c.h.b16 %v244
        %v516 = vunpack.c.l.b16 %v245
        %v517 = vunpack.c.h.b16 %v245
        %v518 = vunpack.c.l.b16 %v246
        %v519 = vunpack.c.h.b16 %v246
        %v520 = vunpack.c.l.b16 %v247
        %v521 = vunpack.c.h.b16 %v247
        %v522 = vunpack.c.l.b16 %v248
        %v523 = vunpack.c.h.b16 %v248
        %v524 = vunpack.c.l.b16 %v249
        %v525 = vunpack.c.h.b16 %v249
        %v526 = vunpack.c.l.b16 %v250
        %v527 = vunpack.c.h.b16 %v250
        %v528 = vunpack.c.l.b16 %v251
        %v529 = vunpack.c.h.b16 %v251
        %v530 = vunpack.c.l.b16 %v252
        %v531 = vunpack.c.h.b16 %v252
        %v532 = vunpack.c.l.b16 %v253
        %v533 = vunpack.c.h.b16 %v253
        %v534 = vunpack.c.l.b16 %v254
        %v535 = vunpack.c.h.b16 %v254
        %v536 = vunpack.c.l.b16 %v255
        %v537 = vunpack.c.h.b16 %v255
        %v538 = vunpack.c.l.b16 %v256
        %v539 = vunpack.c.h.b16 %v256
        %v540 = vunpack.c.l.b16 %v257
        %v541 = vunpack.c.h.b16 %v257
        %v542 = vunpack.c.l.b16 %v258
        %v543 = vunpack.c.h.b16 %v258
        %v544 = vunpack.c.l.b16 %v259
        %v545 = vunpack.c.h.b16 %v259
        %v546 = vunpack.c.l.b16 %v260
        %v547 = vunpack.c.h.b16 %v260
        %v548 = vunpack.c.l.b16 %v261
        %v549 = vunpack.c.h.b16 %v261
        %v550 = vunpack.c.l.b16 %v262
        %v551 = vunpack.c.h.b16 %v262
        %v552 = vunpack.c.l.b16 %v263
        %v553 = vunpack.c.h.b16 %v263
        %v554 = vunpack.c.l.b16 %v264
        %v555 = vunpack.c.h.b16 %v264
        %v556 = vunpack.c.l.b16 %v265
        %v557 = vunpack.c.h.b16 %v265
        %v558 = vunpack.c.l.b16 %v266
        %v559 = vunpack.c.h.b16 %v266
        %v560 = vunpack.c.l.b16 %v267
        %v561 = vunpack.c.h.b16 %v267
        %v562 = vunpack.c.l.b16 %v268
        %v563 = vunpack.c.h.b16 %v268
        %v564 = vunpack.c.l.b16 %v269
        %v565 = vunpack.c.h.b16 %v269
        %v566 = vunpack.c.l.b16 %v270
        %v567 = vunpack.c.h.b16 %v270
        %v568 = vunpack.c.l.b16 %v271
        %v569 = vunpack.c.h.b16 %v271
        %v570 = vunpack.c.l.b16 %v272
        %v571 = vunpack.c.h.b16 %v272
        %v572 = vunpack.c.l.b16 %v273
        %v573 = vunpack.c.h.b16 %v273
        %v574 = vunpack.c.l.b16 %v274
        %v575 = vunpack.c.h.b16 %v274
        %v576 = vunpack.c.l.b16 %v275
        %v577 = vunpack.c.h.b16 %v275
        %v578 = vunpack.c.l.b16 %v276
        %v579 = vunpack.c.h.b16 %v276
        %v580 = vunpack.c.l.b16 %v277
        %v581 = vunpack.c.h.b16 %v277
        %v582 = vunpack.c.l.b16 %v278
        %v583 = vunpack.c.h.b16 %v278
        %v584 = vunpack.c.l.b16 %v279
        %v585 = vunpack.c.h.b16 %v279
        %v586 = vunpack.c.l.b16 %v280
        %v587 = vunpack.c.h.b16 %v280
        %v588 = vunpack.c.l.b16 %v281
        %v589 = vunpack.c.h.b16 %v281
        %v590 = vunpack.c.l.b16 %v282
        %v591 = vunpack.c.h.b16 %v282
        %v592 = vunpack.c.l.b16 %v283
        %v593 = vunpack.c.h.b16 %v283
        %v594 = vunpack.c.l.b16 %v284
        %v595 = vunpack.c.h.b16 %v284
        %v596 = vunpack.c.l.b16 %v285
        %v597 = vunpack.c.h.b16 %v285
        %v598 = vunpack.c.l.b16 %v286
        %v599 = vunpack.c.h.b16 %v286
        %v600 = vunpack.c.l.b16 %v287
        %v601 = vunpack.c.h.b16 %v287
        %v602 = vunpack.c.l.b16 %v288
        %v603 = vunpack.c.h.b16 %v288
        %v604 = vunpack.c.l.b16 %v289
        %v605 = vunpack.c.h.b16 %v289
        %v606 = vunpack.c.l.b16 %v290
        %v607 = vunpack.c.h.b16 %v290
        %v608 = vunpack.c.l.b16 %v291
        %v609 = vunpack.c.h.b16 %v291
        %v610 = vunpack.c.l.b16 %v292
        %v611 = vunpack.c.h.b16 %v292
        %v612 = vunpack.c.l.b16 %v293
        %v613 = vunpack.c.h.b16 %v293
        %v614 = vunpack.c.l.b16 %v294
        %v615 = vunpack.c.h.b16 %v294
        %v616 = vunpack.c.l.b16 %v295
        %v617 = vunpack.c.h.b16 %v295
        %v618 = vunpack.c.l.b16 %v296
        %v619 = vunpack.c.h.b16 %v296
        %v620 = vunpack.c.l.b16 %v297
        %v621 = vunpack.c.h.b16 %v297
        %v622 = vunpack.c.l.b16 %v298
        %v623 = vunpack.c.h.b16 %v298
        %v624 = vunpack.c.l.b16 %v299
        %v625 = vunpack.c.h.b16 %v299
        %v626 = vunpack.c.l.b16 %v300
        %v627 = vunpack.c.h.b16 %v300
        %v628 = vunpack.c.l.b16 %v301
        %v629 = vunpack.c.h.b16 %v301
        %v630 = vunpack.c.l.b16 %v302
        %v631 = vunpack.c.h.b16 %v302
        %v632 = vunpack.c.l.b16 %v303
        %v633 = vunpack.c.h.b16 %v303
        %v634 = vunpack.c.l.b16 %v304
        %v635 = vunpack.c.h.b16 %v304
        %v636 = vunpack.c.l.b16 %v305
        %v637 = vunpack.c.h.b16 %v305
        %v638 = vpack.c.b16 %v518, %v510
        %v639 = vpack.c.b16 %v519, %v511
        %v640 = vpack.c.b16 %v520, %v512
        %v641 = vpack.c.b16 %v521, %v513
        %v642 = vpack.c.b16 %v522, %v514
        %v643 = vpack.c.b16 %v523, %v515
        %v644 = vpack.c.b16 %v524, %v516
        %v645 = vpack.c.b16 %v525, %v517
        %v646 = vpack.c.b16 %v534, %v526
        %v647 = vpack.c.b16 %v535, %v527
        %v648 = vpack.c.b16 %v536, %v528
        %v649 = vpack.c.b16 %v537, %v529
        %v650 = vpack.c.b16 %v538, %v530
        %v651 = vpack.c.b16 %v539, %v531
        %v652 = vpack.c.b16 %v540, %v532
        %v653 = vpack.c.b16 %v541, %v533
        %v654 = vpack.c.b16 %v550, %v542
        %v655 = vpack.c.b16 %v551, %v543
        %v656 = vpack.c.b16 %v552, %v544
        %v657 = vpack.c.b16 %v553, %v545
        %v658 = vpack.c.b16 %v554, %v546
        %v659 = vpack.c.b16 %v555, %v547
        %v660 = vpack.c.b16 %v556, %v548
        %v661 = vpack.c.b16 %v557, %v549
        %v662 = vpack.c.b16 %v566, %v558
        %v663 = vpack.c.b16 %v567, %v559
        %v664 = vpack.c.b16 %v568, %v560
        %v665 = vpack.c.b16 %v569, %v561
        %v666 = vpack.c.b16 %v570, %v562
        %v667 = vpack.c.b16 %v571, %v563
        %v668 = vpack.c.b16 %v572, %v564
        %v669 = vpack.c.b16 %v573, %v565
        %v670 = vpack.c.b16 %v582, %v574
        %v671 = vpack.c.b16 %v583, %v575
        %v672 = vpack.c.b16 %v584, %v576
        %v673 = vpack.c.b16 %v585, %v577
        %v674 = vpack.c.b16 %v586, %v578
        %v675 = vpack.c.b16 %v587, %v579
        %v676 = vpack.c.b16 %v588, %v580
        %v677 = vpack.c.b16 %v589, %v581
        %v678 = vpack.c.b16 %v598, %v590
        %v679 = vpack.c.b16 %v599, %v591
        %v680 = vpack.c.b16 %v600, %v592
        %v681 = vpack.c.b16 %v601, %v593
        %v682 = vpack.c.b16 %v602, %v594
        %v683 = vpack.c.b16 %v603, %v595
        %v684 = vpack.c.b16 %v604, %v596
        %v685 = vpack.c.b16 %v605, %v597
        %v686 = vpack.c.b16 %v614, %v606
        %v687 = vpack.c.b16 %v615, %v607
        %v688 = vpack.c.b16 %v616, %v608
        %v689 = vpack.c.b16 %v617, %v609
        %v690 = vpack.c.b16 %v618, %v610
        %v691 = vpack.c.b16 %v619, %v611
        %v692 = vpack.c.b16 %v620, %v612
        %v693 = vpack.c.b16 %v621, %v613
        %v694 = vpack.c.b16 %v630, %v622
        %v695 = vpack.c.b16 %v631, %v623
        %v696 = vpack.c.b16 %v632, %v624
        %v697 = vpack.c.b16 %v633, %v625
        %v698 = vpack.c.b16 %v634, %v626
        %v699 = vpack.c.b16 %v635, %v627
        %v700 = vpack.c.b16 %v636, %v628
        %v701 = vpack.c.b16 %v637, %v629
        %v894 = vunpack.c.l.b16 %v306
        %v895 = vunpack.c.h.b16 %v306
        %v896 = vunpack.c.l.b16 %v307
        %v897 = vunpack.c.h.b16 %v307
        %v898 = vunpack.c.l.b16 %v308
        %v899 = vunpack.c.h.b16 %v308
        %v900 = vunpack.c.l.b16 %v309
        %v901 = vunpack.c.h.b16 %v309
        %v902 = vunpack.c.l.b16 %v310
        %v903 = vunpack.c.h.b16 %v310
        %v904 = vunpack.c.l.b16 %v311
        %v905 = vunpack.c.h.b16 %v311
        %v906 = vunpack.c.l.b16 %v312
        %v907 = vunpack.c.h.b16 %v312
        %v908 = vunpack.c.l.b16 %v313
        %v909 = vunpack.c.h.b16 %v313
        %v910 = vunpack.c.l.b16 %v314
        %v911 = vunpack.c.h.b16 %v314
        %v912 = vunpack.c.l.b16 %v315
        %v913 = vunpack.c.h.b16 %v315
        %v914 = vunpack.c.l.b16 %v316
        %v915 = vunpack.c.h.b16 %v316
        %v916 = vunpack.c.l.b16 %v317
        %v917 = vunpack.c.h.b16 %v317
        %v918 = vunpack.c.l.b16 %v318
        %v919 = vunpack.c.h.b16 %v318
        %v920 = vunpack.c.l.b16 %v319
        %v921 = vunpack.c.h.b16 %v319
        %v922 = vunpack.c.l.b16 %v320
        %v923 = vunpack.c.h.b16 %v320
        %v924 = vunpack.c.l.b16 %v321
        %v925 = vunpack.c.h.b16 %v321
        %v926 = vunpack.c.l.b16 %v322
        %v927 = vunpack.c.h.b16 %v322
        %v928 = vunpack.c.l.b16 %v323
        %v929 = vunpack.c.h.b16 %v323
        %v930 = vunpack.c.l.b16 %v324
        %v931 = vunpack.c.h.b16 %v324
        %v932 = vunpack.c.l.b16 %v325
        %v933 = vunpack.c.h.b16 %v325
        %v934 = vunpack.c.l.b16 %v326
        %v935 = vunpack.c.h.b16 %v326
        %v936 = vunpack.c.l.b16 %v327
        %v937 = vunpack.c.h.b16 %v327
        %v938 = vunpack.c.l.b16 %v328
        %v939 = vunpack.c.h.b16 %v328
        %v940 = vunpack.c.l.b16 %v329
        %v941 = vunpack.c.h.b16 %v329
        %v942 = vunpack.c.l.b16 %v330
        %v943 = vunpack.c.h.b16 %v330
        %v944 = vunpack.c.l.b16 %v331
        %v945 = vunpack.c.h.b16 %v331
        %v946 = vunpack.c.l.b16 %v332
        %v947 = vunpack.c.h.b16 %v332
        %v948 = vunpack.c.l.b16 %v333
        %v949 = vunpack.c.h.b16 %v333
        %v950 = vunpack.c.l.b16 %v334
        %v951 = vunpack.c.h.b16 %v334
        %v952 = vunpack.c.l.b16 %v335
        %v953 = vunpack.c.h.b16 %v335
        %v954 = vunpack.c.l.b16 %v336
        %v955 = vunpack.c.h.b16 %v336
        %v956 = vunpack.c.l.b16 %v337
        %v957 = vunpack.c.h.b16 %v337
        %v958 = vunpack.c.l.b16 %v338
        %v959 = vunpack.c.h.b16 %v338
        %v960 = vunpack.c.l.b16 %v339
        %v961 = vunpack.c.h.b16 %v339
        %v962 = vunpack.c.l.b16 %v340
        %v963 = vunpack.c.h.b16 %v340
        %v964 = vunpack.c.l.b16 %v341
        %v965 = vunpack.c.h.b16 %v341
        %v966 = vunpack.c.l.b16 %v342
        %v967 = vunpack.c.h.b16 %v342
        %v968 = vunpack.c.l.b16 %v343
        %v969 = vunpack.c.h.b16 %v343
        %v970 = vunpack.c.l.b16 %v344
        %v971 = vunpack.c.h.b16 %v344
        %v972 = vunpack.c.l.b16 %v345
        %v973 = vunpack.c.h.b16 %v345
        %v974 = vunpack.c.l.b16 %v346
        %v975 = vunpack.c.h.b16 %v346
        %v976 = vunpack.c.l.b16 %v347
        %v977 = vunpack.c.h.b16 %v347
        %v978 = vunpack.c.l.b16 %v348
        %v979 = vunpack.c.h.b16 %v348
        %v980 = vunpack.c.l.b16 %v349
        %v981 = vunpack.c.h.b16 %v349
        %v982 = vunpack.c.l.b16 %v350
        %v983 = vunpack.c.h.b16 %v350
        %v984 = vunpack.c.l.b16 %v351
        %v985 = vunpack.c.h.b16 %v351
        %v986 = vunpack.c.l.b16 %v352
        %v987 = vunpack.c.h.b16 %v352
        %v988 = vunpack.c.l.b16 %v353
        %v989 = vunpack.c.h.b16 %v353
        %v990 = vunpack.c.l.b16 %v354
        %v991 = vunpack.c.h.b16 %v354
        %v992 = vunpack.c.l.b16 %v355
        %v993 = vunpack.c.h.b16 %v355
        %v994 = vunpack.c.l.b16 %v356
        %v995 = vunpack.c.h.b16 %v356
        %v996 = vunpack.c.l.b16 %v357
        %v997 = vunpack.c.h.b16 %v357
        %v998 = vunpack.c.l.b16 %v358
        %v999 = vunpack.c.h.b16 %v358
        %v1000 = vunpack.c.l.b16 %v359
        %v1001 = vunpack.c.h.b16 %v359
        %v1002 = vunpack.c.l.b16 %v360
        %v1003 = vunpack.c.h.b16 %v360
        %v1004 = vunpack.c.l.b16 %v361
        %v1005 = vunpack.c.h.b16 %v361
        %v1006 = vunpack.c.l.b16 %v362
        %v1007 = vunpack.c.h.b16 %v362
        %v1008 = vunpack.c.l.b16 %v363
        %v1009 = vunpack.c.h.b16 %v363
        %v1010 = vunpack.c.l.b16 %v364
        %v1011 = vunpack.c.h.b16 %v364
        %v1012 = vunpack.c.l.b16 %v365
        %v1013 = vunpack.c.h.b16 %v365
        %v1014 = vunpack.c.l.b16 %v366
        %v1015 = vunpack.c.h.b16 %v366
        %v1016 = vunpack.c.l.b16 %v367
        %v1017 = vunpack.c.h.b16 %v367
        %v1018 = vunpack.c.l.b16 %v368
        %v1019 = vunpack.c.h.b16 %v368
        %v1020 = vunpack.c.l.b16 %v369
        %v1021 = vunpack.c.h.b16 %v369
        %v1022 = vunpack.c.l.b16 %v370
        %v1023 = vunpack.c.h.b16 %v370
        %v1024 = vunpack.c.l.b16 %v371
        %v1025 = vunpack.c.h.b16 %v371
        %v1026 = vunpack.c.l.b16 %v372
        %v1027 = vunpack.c.h.b16 %v372
        %v1028 = vunpack.c.l.b16 %v373
        %v1029 = vunpack.c.h.b16 %v373
        %v1030 = vunpack.c.l.b16 %v374
        %v1031 = vunpack.c.h.b16 %v374
        %v1032 = vunpack.c.l.b16 %v375
        %v1033 = vunpack.c.h.b16 %v375
        %v1034 = vunpack.c.l.b16 %v376
        %v1035 = vunpack.c.h.b16 %v376
        %v1036 = vunpack.c.l.b16 %v377
        %v1037 = vunpack.c.h.b16 %v377
        %v1038 = vunpack.c.l.b16 %v378
        %v1039 = vunpack.c.h.b16 %v378
        %v1040 = vunpack.c.l.b16 %v379
        %v1041 = vunpack.c.h.b16 %v379
        %v1042 = vunpack.c.l.b16 %v380
        %v1043 = vunpack.c.h.b16 %v380
        %v1044 = vunpack.c.l.b16 %v381
        %v1045 = vunpack.c.h.b16 %v381
        %v1046 = vunpack.c.l.b16 %v382
        %v1047 = vunpack.c.h.b16 %v382
        %v1048 = vunpack.c.l.b16 %v383
        %v1049 = vunpack.c.h.b16 %v383
        %v1050 = vunpack.c.l.b16 %v384
        %v1051 = vunpack.c.h.b16 %v384
        %v1052 = vunpack.c.l.b16 %v385
        %v1053 = vunpack.c.h.b16 %v385
        %v1054 = vunpack.c.l.b16 %v386
        %v1055 = vunpack.c.h.b16 %v386
        %v1056 = vunpack.c.l.b16 %v387
        %v1057 = vunpack.c.h.b16 %v387
        %v1058 = vunpack.c.l.b16 %v388
        %v1059 = vunpack.c.h.b16 %v388
        %v1060 = vunpack.c.l.b16 %v389
        %v1061 = vunpack.c.h.b16 %v389
        %v1062 = vunpack.c.l.b16 %v390
        %v1063 = vunpack.c.h.b16 %v390
        %v1064 = vunpack.c.l.b16 %v391
        %v1065 = vunpack.c.h.b16 %v391
        %v1066 = vunpack.c.l.b16 %v392
        %v1067 = vunpack.c.h.b16 %v392
        %v1068 = vunpack.c.l.b16 %v393
        %v1069 = vunpack.c.h.b16 %v393
        %v1070 = vunpack.c.l.b16 %v394
        %v1071 = vunpack.c.h.b16 %v394
        %v1072 = vunpack.c.l.b16 %v395
        %v1073 = vunpack.c.h.b16 %v395
        %v1074 = vunpack.c.l.b16 %v396
        %v1075 = vunpack.c.h.b16 %v396
        %v1076 = vunpack.c.l.b16 %v397
        %v1077 = vunpack.c.h.b16 %v397
        %v1078 = vunpack.c.l.b16 %v398
        %v1079 = vunpack.c.h.b16 %v398
        %v1080 = vunpack.c.l.b16 %v399
        %v1081 = vunpack.c.h.b16 %v399
        %v1082 = vunpack.c.l.b16 %v400
        %v1083 = vunpack.c.h.b16 %v400
        %v1084 = vunpack.c.l.b16 %v401
        %v1085 = vunpack.c.h.b16 %v401
        %v1086 = vunpack.c.l.b16 %v402
        %v1087 = vunpack.c.h.b16 %v402
        %v1088 = vunpack.c.l.b16 %v403
        %v1089 = vunpack.c.h.b16 %v403
        %v1090 = vunpack.c.l.b16 %v404
        %v1091 = vunpack.c.h.b16 %v404
        %v1092 = vunpack.c.l.b16 %v405
        %v1093 = vunpack.c.h.b16 %v405
        %v1094 = vunpack.c.l.b16 %v406
        %v1095 = vunpack.c.h.b16 %v406
        %v1096 = vunpack.c.l.b16 %v407
        %v1097 = vunpack.c.h.b16 %v407
        %v1098 = vunpack.c.l.b16 %v408
        %v1099 = vunpack.c.h.b16 %v408
        %v1100 = vunpack.c.l.b16 %v409
        %v1101 = vunpack.c.h.b16 %v409
        %v1102 = vunpack.c.l.b16 %v410
        %v1103 = vunpack.c.h.b16 %v410
        %v1104 = vunpack.c.l.b16 %v411
        %v1105 = vunpack.c.h.b16 %v411
        %v1106 = vunpack.c.l.b16 %v412
        %v1107 = vunpack.c.h.b16 %v412
        %v1108 = vunpack.c.l.b16 %v413
        %v1109 = vunpack.c.h.b16 %v413
        %v1110 = vunpack.c.l.b16 %v414
        %v1111 = vunpack.c.h.b16 %v414
        %v1112 = vunpack.c.l.b16 %v415
        %v1113 = vunpack.c.h.b16 %v415
        %v1114 = vunpack.c.l.b16 %v416
        %v1115 = vunpack.c.h.b16 %v416
        %v1116 = vunpack.c.l.b16 %v417
        %v1117 = vunpack.c.h.b16 %v417
        %v1118 = vunpack.c.l.b16 %v418
        %v1119 = vunpack.c.h.b16 %v418
        %v1120 = vunpack.c.l.b16 %v419
        %v1121 = vunpack.c.h.b16 %v419
        %v1122 = vunpack.c.l.b16 %v420
        %v1123 = vunpack.c.h.b16 %v420
        %v1124 = vunpack.c.l.b16 %v421
        %v1125 = vunpack.c.h.b16 %v421
        %v1126 = vunpack.c.l.b16 %v422
        %v1127 = vunpack.c.h.b16 %v422
        %v1128 = vunpack.c.l.b16 %v423
        %v1129 = vunpack.c.h.b16 %v423
        %v1130 = vunpack.c.l.b16 %v424
        %v1131 = vunpack.c.h.b16 %v424
        %v1132 = vunpack.c.l.b16 %v425
        %v1133 = vunpack.c.h.b16 %v425
        %v1134 = vunpack.c.l.b16 %v426
        %v1135 = vunpack.c.h.b16 %v426
        %v1136 = vunpack.c.l.b16 %v427
        %v1137 = vunpack.c.h.b16 %v427
        %v1138 = vunpack.c.l.b16 %v428
        %v1139 = vunpack.c.h.b16 %v428
        %v1140 = vunpack.c.l.b16 %v429
        %v1141 = vunpack.c.h.b16 %v429
        %v1142 = vunpack.c.l.b16 %v430
        %v1143 = vunpack.c.h.b16 %v430
        %v1144 = vunpack.c.l.b16 %v431
        %v1145 = vunpack.c.h.b16 %v431
        %v1146 = vunpack.c.l.b16 %v432
        %v1147 = vunpack.c.h.b16 %v432
        %v1148 = vunpack.c.l.b16 %v433
        %v1149 = vunpack.c.h.b16 %v433
        %v1150 = vpack.c.b16 %v896, %v894
        %v1151 = vpack.c.b16 %v897, %v895
        %v1152 = vpack.c.b16 %v900, %v898
        %v1153 = vpack.c.b16 %v901, %v899
        %v1154 = vpack.c.b16 %v904, %v902
        %v1155 = vpack.c.b16 %v905, %v903
        %v1156 = vpack.c.b16 %v908, %v906
        %v1157 = vpack.c.b16 %v909, %v907
        %v1158 = vpack.c.b16 %v912, %v910
        %v1159 = vpack.c.b16 %v913, %v911
        %v1160 = vpack.c.b16 %v916, %v914
        %v1161 = vpack.c.b16 %v917, %v915
        %v1162 = vpack.c.b16 %v920, %v918
        %v1163 = vpack.c.b16 %v921, %v919
        %v1164 = vpack.c.b16 %v924, %v922
        %v1165 = vpack.c.b16 %v925, %v923
        %v1166 = vpack.c.b16 %v928, %v926
        %v1167 = vpack.c.b16 %v929, %v927
        %v1168 = vpack.c.b16 %v932, %v930
        %v1169 = vpack.c.b16 %v933, %v931
        %v1170 = vpack.c.b16 %v936, %v934
        %v1171 = vpack.c.b16 %v937, %v935
        %v1172 = vpack.c.b16 %v940, %v938
        %v1173 = vpack.c.b16 %v941, %v939
        %v1174 = vpack.c.b16 %v944, %v942
        %v1175 = vpack.c.b16 %v945, %v943
        %v1176 = vpack.c.b16 %v948, %v946
        %v1177 = vpack.c.b16 %v949, %v947
        %v1178 = vpack.c.b16 %v952, %v950
        %v1179 = vpack.c.b16 %v953, %v951
        %v1180 = vpack.c.b16 %v956, %v954
        %v1181 = vpack.c.b16 %v957, %v955
        %v1182 = vpack.c.b16 %v960, %v958
        %v1183 = vpack.c.b16 %v961, %v959
        %v1184 = vpack.c.b16 %v964, %v962
        %v1185 = vpack.c.b16 %v965, %v963
        %v1186 = vpack.c.b16 %v968, %v966
        %v1187 = vpack.c.b16 %v969, %v967
        %v1188 = vpack.c.b16 %v972, %v970
        %v1189 = vpack.c.b16 %v973, %v971
        %v1190 = vpack.c.b16 %v976, %v974
        %v1191 = vpack.c.b16 %v977, %v975
        %v1192 = vpack.c.b16 %v980, %v978
        %v1193 = vpack.c.b16 %v981, %v979
        %v1194 = vpack.c.b16 %v984, %v982
        %v1195 = vpack.c.b16 %v985, %v983
        %v1196 = vpack.c.b16 %v988, %v986
        %v1197 = vpack.c.b16 %v989, %v987
        %v1198 = vpack.c.b16 %v992, %v990
        %v1199 = vpack.c.b16 %v993, %v991
        %v1200 = vpack.c.b16 %v996, %v994
        %v1201 = vpack.c.b16 %v997, %v995
        %v1202 = vpack.c.b16 %v1000, %v998
        %v1203 = vpack.c.b16 %v1001, %v999
        %v1204 = vpack.c.b16 %v1004, %v1002
        %v1205 = vpack.c.b16 %v1005, %v1003
        %v1206 = vpack.c.b16 %v1008, %v1006
        %v1207 = vpack.c.b16 %v1009, %v1007
        %v1208 = vpack.c.b16 %v1012, %v1010
        %v1209 = vpack.c.b16 %v1013, %v1011
        %v1210 = vpack.c.b16 %v1016, %v1014
        %v1211 = vpack.c.b16 %v1017, %v1015
        %v1212 = vpack.c.b16 %v1020, %v1018
        %v1213 = vpack.c.b16 %v1021, %v1019
        %v1214 = vpack.c.b16 %v1024, %v1022
        %v1215 = vpack.c.b16 %v1025, %v1023
        %v1216 = vpack.c.b16 %v1028, %v1026
        %v1217 = vpack.c.b16 %v1029, %v1027
        %v1218 = vpack.c.b16 %v1032, %v1030
        %v1219 = vpack.c.b16 %v1033, %v1031
        %v1220 = vpack.c.b16 %v1036, %v1034
        %v1221 = vpack.c.b16 %v1037, %v1035
        %v1222 = vpack.c.b16 %v1040, %v1038
        %v1223 = vpack.c.b16 %v1041, %v1039
        %v1224 = vpack.c.b16 %v1044, %v1042
        %v1225 = vpack.c.b16 %v1045, %v1043
        %v1226 = vpack.c.b16 %v1048, %v1046
        %v1227 = vpack.c.b16 %v1049, %v1047
        %v1228 = vpack.c.b16 %v1052, %v1050
        %v1229 = vpack.c.b16 %v1053, %v1051
        %v1230 = vpack.c.b16 %v1056, %v1054
        %v1231 = vpack.c.b16 %v1057, %v1055
        %v1232 = vpack.c.b16 %v1060, %v1058
        %v1233 = vpack.c.b16 %v1061, %v1059
        %v1234 = vpack.c.b16 %v1064, %v1062
        %v1235 = vpack.c.b16 %v1065, %v1063
        %v1236 = vpack.c.b16 %v1068, %v1066
        %v1237 = vpack.c.b16 %v1069, %v1067
        %v1238 = vpack.c.b16 %v1072, %v1070
        %v1239 = vpack.c.b16 %v1073, %v1071
        %v1240 = vpack.c.b16 %v1076, %v1074
        %v1241 = vpack.c.b16 %v1077, %v1075
        %v1242 = vpack.c.b16 %v1080, %v1078
        %v1243 = vpack.c.b16 %v1081, %v1079
        %v1244 = vpack.c.b16 %v1084, %v1082
        %v1245 = vpack.c.b16 %v1085, %v1083
        %v1246 = vpack.c.b16 %v1088, %v1086
        %v1247 = vpack.c.b16 %v1089, %v1087
        %v1248 = vpack.c.b16 %v1092, %v1090
        %v1249 = vpack.c.b16 %v1093, %v1091
        %v1250 = vpack.c.b16 %v1096, %v1094
        %v1251 = vpack.c.b16 %v1097, %v1095
        %v1252 = vpack.c.b16 %v1100, %v1098
        %v1253 = vpack.c.b16 %v1101, %v1099
        %v1254 = vpack.c.b16 %v1104, %v1102
        %v1255 = vpack.c.b16 %v1105, %v1103
        %v1256 = vpack.c.b16 %v1108, %v1106
        %v1257 = vpack.c.b16 %v1109, %v1107
        %v1258 = vpack.c.b16 %v1112, %v1110
        %v1259 = vpack.c.b16 %v1113, %v1111
        %v1260 = vpack.c.b16 %v1116, %v1114
        %v1261 = vpack.c.b16 %v1117, %v1115
        %v1262 = vpack.c.b16 %v1120, %v1118
        %v1263 = vpack.c.b16 %v1121, %v1119
        %v1264 = vpack.c.b16 %v1124, %v1122
        %v1265 = vpack.c.b16 %v1125, %v1123
        %v1266 = vpack.c.b16 %v1128, %v1126
        %v1267 = vpack.c.b16 %v1129, %v1127
        %v1268 = vpack.c.b16 %v1132, %v1130
        %v1269 = vpack.c.b16 %v1133, %v1131
        %v1270 = vpack.c.b16 %v1136, %v1134
        %v1271 = vpack.c.b16 %v1137, %v1135
        %v1272 = vpack.c.b16 %v1140, %v1138
        %v1273 = vpack.c.b16 %v1141, %v1139
        %v1274 = vpack.c.b16 %v1144, %v1142
        %v1275 = vpack.c.b16 %v1145, %v1143
        %v1276 = vpack.c.b16 %v1148, %v1146
        %v1277 = vpack.c.b16 %v1149, %v1147
        %1406 = vmatprep.subr.bf16.mxu0 %v1151
        %1407 = vmatpush1.bf16.msra.mxu0 %v1150
        %1408 = vmatprep.subr.bf16.mxu0 %v1153
        %1409 = vmatpush1.bf16.msra.mxu0 %v1152
        %1410 = vmatprep.subr.bf16.mxu0 %v1155
        %1411 = vmatpush1.bf16.msra.mxu0 %v1154
        %1412 = vmatprep.subr.bf16.mxu0 %v1157
        %1413 = vmatpush1.bf16.msra.mxu0 %v1156
        %1414 = vmatprep.subr.bf16.mxu0 %v1159
        %1415 = vmatpush1.bf16.msra.mxu0 %v1158
        %1416 = vmatprep.subr.bf16.mxu0 %v1161
        %1417 = vmatpush1.bf16.msra.mxu0 %v1160
        %1418 = vmatprep.subr.bf16.mxu0 %v1163
        %1419 = vmatpush1.bf16.msra.mxu0 %v1162
        %1420 = vmatprep.subr.bf16.mxu0 %v1165
        %1421 = vmatpush1.bf16.msra.mxu0 %v1164
        %1422 = vmatprep.subr.bf16.mxu0 %v1167
        %1423 = vmatpush1.bf16.msra.mxu0 %v1166
        %1424 = vmatprep.subr.bf16.mxu0 %v1169
        %1425 = vmatpush1.bf16.msra.mxu0 %v1168
        %1426 = vmatprep.subr.bf16.mxu0 %v1171
        %1427 = vmatpush1.bf16.msra.mxu0 %v1170
        %1428 = vmatprep.subr.bf16.mxu0 %v1173
        %1429 = vmatpush1.bf16.msra.mxu0 %v1172
        %1430 = vmatprep.subr.bf16.mxu0 %v1175
        %1431 = vmatpush1.bf16.msra.mxu0 %v1174
        %1432 = vmatprep.subr.bf16.mxu0 %v1177
        %1433 = vmatpush1.bf16.msra.mxu0 %v1176
        %1434 = vmatprep.subr.bf16.mxu0 %v1179
        %1435 = vmatpush1.bf16.msra.mxu0 %v1178
        %1436 = vmatprep.subr.bf16.mxu0 %v1181
        %1437 = vmatpush1.bf16.msra.mxu0 %v1180
        %1438 = vmatprep.mubr.bf16.mxu0 %v639
        %1439 = vmatmul.mubr.bf16.gmra.mrb[0].mxu0 %v638
        %v1440 = vpop.f32.mrb[0].mxu0
        %v1441 = vadd.f32 %v439, %v1440
        %v1442 = vpop.f32.mrb[0].mxu0
        %v1443 = vadd.f32 %v443, %v1442
        %v1444 = vpop.f32.mrb[0].mxu0
        %v1445 = vadd.f32 %v439, %v1444
        %v1446 = vpop.f32.mrb[0].mxu0
        %v1447 = vadd.f32 %v443, %v1446
        %1448 = vmatprep.mubr.bf16.mxu0 %v647
        %1449 = vmatmul.mubr.bf16.gmra.mrb[0].mxu0 %v646
        %v1450 = vpop.f32.mrb[0].mxu0
        %v1451 = vadd.f32 %v439, %v1450
        %v1452 = vpop.f32.mrb[0].mxu0
        %v1453 = vadd.f32 %v443, %v1452
        %v1454 = vpop.f32.mrb[0].mxu0
        %v1455 = vadd.f32 %v439, %v1454
        %v1456 = vpop.f32.mrb[0].mxu0
        %v1457 = vadd.f32 %v443, %v1456
        %1458 = vmatprep.mubr.bf16.mxu0 %v655
        %1459 = vmatmul.mubr.bf16.gmra.mrb[0].mxu0 %v654
        %v1460 = vpop.f32.mrb[0].mxu0
        %v1461 = vadd.f32 %v439, %v1460
        %v1462 = vpop.f32.mrb[0].mxu0
        %v1463 = vadd.f32 %v443, %v1462
        %v1464 = vpop.f32.mrb[0].mxu0
        %v1465 = vadd.f32 %v439, %v1464
        %v1466 = vpop.f32.mrb[0].mxu0
        %v1467 = vadd.f32 %v443, %v1466
        %1468 = vmatprep.mubr.bf16.mxu0 %v663
        %1469 = vmatmul.mubr.bf16.gmra.mrb[0].mxu0 %v662
        %v1470 = vpop.f32.mrb[0].mxu0
        %v1471 = vadd.f32 %v439, %v1470
        %v1472 = vpop.f32.mrb[0].mxu0
        %v1473 = vadd.f32 %v443, %v1472
        %v1474 = vpop.f32.mrb[0].mxu0
        %v1475 = vadd.f32 %v439, %v1474
        %v1476 = vpop.f32.mrb[0].mxu0
        %v1477 = vadd.f32 %v443, %v1476
        %1478 = vmatprep.mubr.bf16.mxu0 %v671
        %1479 = vmatmul.mubr.bf16.gmra.mrb[0].mxu0 %v670
        %v1480 = vpop.f32.mrb[0].mxu0
        %v1481 = vadd.f32 %v439, %v1480
        %v1482 = vpop.f32.mrb[0].mxu0
        %v1483 = vadd.f32 %v443, %v1482
        %v1484 = vpop.f32.mrb[0].mxu0
        %v1485 = vadd.f32 %v439, %v1484
        %v1486 = vpop.f32.mrb[0].mxu0
        %v1487 = vadd.f32 %v443, %v1486
        %1488 = vmatprep.mubr.bf16.mxu0 %v679
        %1489 = vmatmul.mubr.bf16.gmra.mrb[0].mxu0 %v678
        %v1490 = vpop.f32.mrb[0].mxu0
        %v1491 = vadd.f32 %v439, %v1490
        %v1492 = vpop.f32.mrb[0].mxu0
        %v1493 = vadd.f32 %v443, %v1492
        %v1494 = vpop.f32.mrb[0].mxu0
        %v1495 = vadd.f32 %v439, %v1494
        %v1496 = vpop.f32.mrb[0].mxu0
        %v1497 = vadd.f32 %v443, %v1496
        %1498 = vmatprep.mubr.bf16.mxu0 %v687
        %1499 = vmatmul.mubr.bf16.gmra.mrb[0].mxu0 %v686
        %v1500 = vpop.f32.mrb[0].mxu0
        %v1501 = vadd.f32 %v439, %v1500
        %v1502 = vpop.f32.mrb[0].mxu0
        %v1503 = vadd.f32 %v443, %v1502
        %v1504 = vpop.f32.mrb[0].mxu0
        %v1505 = vadd.f32 %v439, %v1504
        %v1506 = vpop.f32.mrb[0].mxu0
        %v1507 = vadd.f32 %v443, %v1506
        %1508 = vmatprep.mubr.bf16.mxu0 %v695
        %1509 = vmatmul.mubr.bf16.gmra.mrb[0].mxu0 %v694
        %v1510 = vpop.f32.mrb[0].mxu0
        %v1511 = vadd.f32 %v439, %v1510
        %v1512 = vpop.f32.mrb[0].mxu0
        %v1513 = vadd.f32 %v443, %v1512
        %v1514 = vpop.f32.mrb[0].mxu0
        %v1515 = vadd.f32 %v439, %v1514
        %v1516 = vpop.f32.mrb[0].mxu0
        %v1517 = vadd.f32 %v443, %v1516
        %1518 = vdwg.mxu0
        %1519 = vmatprep.subr.bf16.mxu0 %v1183
        %1520 = vmatpush1.bf16.msra.mxu0 %v1182
        %1521 = vmatprep.subr.bf16.mxu0 %v1185
        %1522 = vmatpush1.bf16.msra.mxu0 %v1184
        %1523 = vmatprep.subr.bf16.mxu0 %v1187
        %1524 = vmatpush1.bf16.msra.mxu0 %v1186
        %1525 = vmatprep.subr.bf16.mxu0 %v1189
        %1526 = vmatpush1.bf16.msra.mxu0 %v1188
        %1527 = vmatprep.subr.bf16.mxu0 %v1191
        %1528 = vmatpush1.bf16.msra.mxu0 %v1190
        %1529 = vmatprep.subr.bf16.mxu0 %v1193
        %1530 = vmatpush1.bf16.msra.mxu0 %v1192
        %1531 = vmatprep.subr.bf16.mxu0 %v1195
        %1532 = vmatpush1.bf16.msra.mxu0 %v1194
        %1533 = vmatprep.subr.bf16.mxu0 %v1197
        %1534 = vmatpush1.bf16.msra.mxu0 %v1196
        %1535 = vmatprep.subr.bf16.mxu0 %v1199
        %1536 = vmatpush1.bf16.msra.mxu0 %v1198
        %1537 = vmatprep.subr.bf16.mxu0 %v1201
        %1538 = vmatpush1.bf16.msra.mxu0 %v1200
        %1539 = vmatprep.subr.bf16.mxu0 %v1203
        %1540 = vmatpush1.bf16.msra.mxu0 %v1202
        %1541 = vmatprep.subr.bf16.mxu0 %v1205
        %1542 = vmatpush1.bf16.msra.mxu0 %v1204
        %1543 = vmatprep.subr.bf16.mxu0 %v1207
        %1544 = vmatpush1.bf16.msra.mxu0 %v1206
        %1545 = vmatprep.subr.bf16.mxu0 %v1209
        %1546 = vmatpush1.bf16.msra.mxu0 %v1208
        %1547 = vmatprep.subr.bf16.mxu0 %v1211
        %1548 = vmatpush1.bf16.msra.mxu0 %v1210
        %1549 = vmatprep.subr.bf16.mxu0 %v1213
        %1550 = vmatpush1.bf16.msra.mxu0 %v1212
        %1551 = vmatprep.mubr.bf16.mxu0 %v641
        %1552 = vmatmul.mubr.bf16.gmra.mrb[0].mxu0 %v640
        %v1553 = vpop.f32.mrb[0].mxu0
        %v1554 = vadd.f32 %v1441, %v1553
        %v1555 = vpop.f32.mrb[0].mxu0
        %v1556 = vadd.f32 %v1443, %v1555
        %v1557 = vpop.f32.mrb[0].mxu0
        %v1558 = vadd.f32 %v1445, %v1557
        %v1559 = vpop.f32.mrb[0].mxu0
        %v1560 = vadd.f32 %v1447, %v1559
        %1561 = vmatprep.mubr.bf16.mxu0 %v649
        %1562 = vmatmul.mubr.bf16.gmra.mrb[0].mxu0 %v648
        %v1563 = vpop.f32.mrb[0].mxu0
        %v1564 = vadd.f32 %v1451, %v1563
        %v1565 = vpop.f32.mrb[0].mxu0
        %v1566 = vadd.f32 %v1453, %v1565
        %v1567 = vpop.f32.mrb[0].mxu0
        %v1568 = vadd.f32 %v1455, %v1567
        %v1569 = vpop.f32.mrb[0].mxu0
        %v1570 = vadd.f32 %v1457, %v1569
        %1571 = vmatprep.mubr.bf16.mxu0 %v657
        %1572 = vmatmul.mubr.bf16.gmra.mrb[0].mxu0 %v656
        %v1573 = vpop.f32.mrb[0].mxu0
        %v1574 = vadd.f32 %v1461, %v1573
        %v1575 = vpop.f32.mrb[0].mxu0
        %v1576 = vadd.f32 %v1463, %v1575
        %v1577 = vpop.f32.mrb[0].mxu0
        %v1578 = vadd.f32 %v1465, %v1577
        %v1579 = vpop.f32.mrb[0].mxu0
        %v1580 = vadd.f32 %v1467, %v1579
        %1581 = vmatprep.mubr.bf16.mxu0 %v665
        %1582 = vmatmul.mubr.bf16.gmra.mrb[0].mxu0 %v664
        %v1583 = vpop.f32.mrb[0].mxu0
        %v1584 = vadd.f32 %v1471, %v1583
        %v1585 = vpop.f32.mrb[0].mxu0
        %v1586 = vadd.f32 %v1473, %v1585
        %v1587 = vpop.f32.mrb[0].mxu0
        %v1588 = vadd.f32 %v1475, %v1587
        %v1589 = vpop.f32.mrb[0].mxu0
        %v1590 = vadd.f32 %v1477, %v1589
        %1591 = vmatprep.mubr.bf16.mxu0 %v673
        %1592 = vmatmul.mubr.bf16.gmra.mrb[0].mxu0 %v672
        %v1593 = vpop.f32.mrb[0].mxu0
        %v1594 = vadd.f32 %v1481, %v1593
        %v1595 = vpop.f32.mrb[0].mxu0
        %v1596 = vadd.f32 %v1483, %v1595
        %v1597 = vpop.f32.mrb[0].mxu0
        %v1598 = vadd.f32 %v1485, %v1597
        %v1599 = vpop.f32.mrb[0].mxu0
        %v1600 = vadd.f32 %v1487, %v1599
        %1601 = vmatprep.mubr.bf16.mxu0 %v681
        %1602 = vmatmul.mubr.bf16.gmra.mrb[0].mxu0 %v680
        %v1603 = vpop.f32.mrb[0].mxu0
        %v1604 = vadd.f32 %v1491, %v1603
        %v1605 = vpop.f32.mrb[0].mxu0
        %v1606 = vadd.f32 %v1493, %v1605
        %v1607 = vpop.f32.mrb[0].mxu0
        %v1608 = vadd.f32 %v1495, %v1607
        %v1609 = vpop.f32.mrb[0].mxu0
        %v1610 = vadd.f32 %v1497, %v1609
        %1611 = vmatprep.mubr.bf16.mxu0 %v689
        %1612 = vmatmul.mubr.bf16.gmra.mrb[0].mxu0 %v688
        %v1613 = vpop.f32.mrb[0].mxu0
        %v1614 = vadd.f32 %v1501, %v1613
        %v1615 = vpop.f32.mrb[0].mxu0
        %v1616 = vadd.f32 %v1503, %v1615
        %v1617 = vpop.f32.mrb[0].mxu0
        %v1618 = vadd.f32 %v1505, %v1617
        %v1619 = vpop.f32.mrb[0].mxu0
        %v1620 = vadd.f32 %v1507, %v1619
        %1621 = vmatprep.mubr.bf16.mxu0 %v697
        %1622 = vmatmul.mubr.bf16.gmra.mrb[0].mxu0 %v696
        %v1623 = vpop.f32.mrb[0].mxu0
        %v1624 = vadd.f32 %v1511, %v1623
        %v1625 = vpop.f32.mrb[0].mxu0
        %v1626 = vadd.f32 %v1513, %v1625
        %v1627 = vpop.f32.mrb[0].mxu0
        %v1628 = vadd.f32 %v1515, %v1627
        %v1629 = vpop.f32.mrb[0].mxu0
        %v1630 = vadd.f32 %v1517, %v1629
        %1631 = vdwg.mxu0
        %1632 = vmatprep.subr.bf16.mxu0 %v1215
        %1633 = vmatpush1.bf16.msra.mxu0 %v1214
        %1634 = vmatprep.subr.bf16.mxu0 %v1217
        %1635 = vmatpush1.bf16.msra.mxu0 %v1216
        %1636 = vmatprep.subr.bf16.mxu0 %v1219
        %1637 = vmatpush1.bf16.msra.mxu0 %v1218
        %1638 = vmatprep.subr.bf16.mxu0 %v1221
        %1639 = vmatpush1.bf16.msra.mxu0 %v1220
        %1640 = vmatprep.subr.bf16.mxu0 %v1223
        %1641 = vmatpush1.bf16.msra.mxu0 %v1222
        %1642 = vmatprep.subr.bf16.mxu0 %v1225
        %1643 = vmatpush1.bf16.msra.mxu0 %v1224
        %1644 = vmatprep.subr.bf16.mxu0 %v1227
        %1645 = vmatpush1.bf16.msra.mxu0 %v1226
        %1646 = vmatprep.subr.bf16.mxu0 %v1229
        %1647 = vmatpush1.bf16.msra.mxu0 %v1228
        %1648 = vmatprep.subr.bf16.mxu0 %v1231
        %1649 = vmatpush1.bf16.msra.mxu0 %v1230
        %1650 = vmatprep.subr.bf16.mxu0 %v1233
        %1651 = vmatpush1.bf16.msra.mxu0 %v1232
        %1652 = vmatprep.subr.bf16.mxu0 %v1235
        %1653 = vmatpush1.bf16.msra.mxu0 %v1234
        %1654 = vmatprep.subr.bf16.mxu0 %v1237
        %1655 = vmatpush1.bf16.msra.mxu0 %v1236
        %1656 = vmatprep.subr.bf16.mxu0 %v1239
        %1657 = vmatpush1.bf16.msra.mxu0 %v1238
        %1658 = vmatprep.subr.bf16.mxu0 %v1241
        %1659 = vmatpush1.bf16.msra.mxu0 %v1240
        %1660 = vmatprep.subr.bf16.mxu0 %v1243
        %1661 = vmatpush1.bf16.msra.mxu0 %v1242
        %1662 = vmatprep.subr.bf16.mxu0 %v1245
        %1663 = vmatpush1.bf16.msra.mxu0 %v1244
        %1664 = vmatprep.mubr.bf16.mxu0 %v643
        %1665 = vmatmul.mubr.bf16.gmra.mrb[0].mxu0 %v642
        %v1666 = vpop.f32.mrb[0].mxu0
        %v1667 = vadd.f32 %v1554, %v1666
        %v1668 = vpop.f32.mrb[0].mxu0
        %v1669 = vadd.f32 %v1556, %v1668
        %v1670 = vpop.f32.mrb[0].mxu0
        %v1671 = vadd.f32 %v1558, %v1670
        %v1672 = vpop.f32.mrb[0].mxu0
        %v1673 = vadd.f32 %v1560, %v1672
        %1674 = vmatprep.mubr.bf16.mxu0 %v651
        %1675 = vmatmul.mubr.bf16.gmra.mrb[0].mxu0 %v650
        %v1676 = vpop.f32.mrb[0].mxu0
        %v1677 = vadd.f32 %v1564, %v1676
        %v1678 = vpop.f32.mrb[0].mxu0
        %v1679 = vadd.f32 %v1566, %v1678
        %v1680 = vpop.f32.mrb[0].mxu0
        %v1681 = vadd.f32 %v1568, %v1680
        %v1682 = vpop.f32.mrb[0].mxu0
        %v1683 = vadd.f32 %v1570, %v1682
        %1684 = vmatprep.mubr.bf16.mxu0 %v659
        %1685 = vmatmul.mubr.bf16.gmra.mrb[0].mxu0 %v658
        %v1686 = vpop.f32.mrb[0].mxu0
        %v1687 = vadd.f32 %v1574, %v1686
        %v1688 = vpop.f32.mrb[0].mxu0
        %v1689 = vadd.f32 %v1576, %v1688
        %v1690 = vpop.f32.mrb[0].mxu0
        %v1691 = vadd.f32 %v1578, %v1690
        %v1692 = vpop.f32.mrb[0].mxu0
        %v1693 = vadd.f32 %v1580, %v1692
        %1694 = vmatprep.mubr.bf16.mxu0 %v667
        %1695 = vmatmul.mubr.bf16.gmra.mrb[0].mxu0 %v666
        %v1696 = vpop.f32.mrb[0].mxu0
        %v1697 = vadd.f32 %v1584, %v1696
        %v1698 = vpop.f32.mrb[0].mxu0
        %v1699 = vadd.f32 %v1586, %v1698
        %v1700 = vpop.f32.mrb[0].mxu0
        %v1701 = vadd.f32 %v1588, %v1700
        %v1702 = vpop.f32.mrb[0].mxu0
        %v1703 = vadd.f32 %v1590, %v1702
        %1704 = vmatprep.mubr.bf16.mxu0 %v675
        %1705 = vmatmul.mubr.bf16.gmra.mrb[0].mxu0 %v674
        %v1706 = vpop.f32.mrb[0].mxu0
        %v1707 = vadd.f32 %v1594, %v1706
        %v1708 = vpop.f32.mrb[0].mxu0
        %v1709 = vadd.f32 %v1596, %v1708
        %v1710 = vpop.f32.mrb[0].mxu0
        %v1711 = vadd.f32 %v1598, %v1710
        %v1712 = vpop.f32.mrb[0].mxu0
        %v1713 = vadd.f32 %v1600, %v1712
        %1714 = vmatprep.mubr.bf16.mxu0 %v683
        %1715 = vmatmul.mubr.bf16.gmra.mrb[0].mxu0 %v682
        %v1716 = vpop.f32.mrb[0].mxu0
        %v1717 = vadd.f32 %v1604, %v1716
        %v1718 = vpop.f32.mrb[0].mxu0
        %v1719 = vadd.f32 %v1606, %v1718
        %v1720 = vpop.f32.mrb[0].mxu0
        %v1721 = vadd.f32 %v1608, %v1720
        %v1722 = vpop.f32.mrb[0].mxu0
        %v1723 = vadd.f32 %v1610, %v1722
        %1724 = vmatprep.mubr.bf16.mxu0 %v691
        %1725 = vmatmul.mubr.bf16.gmra.mrb[0].mxu0 %v690
        %v1726 = vpop.f32.mrb[0].mxu0
        %v1727 = vadd.f32 %v1614, %v1726
        %v1728 = vpop.f32.mrb[0].mxu0
        %v1729 = vadd.f32 %v1616, %v1728
        %v1730 = vpop.f32.mrb[0].mxu0
        %v1731 = vadd.f32 %v1618, %v1730
        %v1732 = vpop.f32.mrb[0].mxu0
        %v1733 = vadd.f32 %v1620, %v1732
        %1734 = vmatprep.mubr.bf16.mxu0 %v699
        %1735 = vmatmul.mubr.bf16.gmra.mrb[0].mxu0 %v698
        %v1736 = vpop.f32.mrb[0].mxu0
        %v1737 = vadd.f32 %v1624, %v1736
        %v1738 = vpop.f32.mrb[0].mxu0
        %v1739 = vadd.f32 %v1626, %v1738
        %v1740 = vpop.f32.mrb[0].mxu0
        %v1741 = vadd.f32 %v1628, %v1740
        %v1742 = vpop.f32.mrb[0].mxu0
        %v1743 = vadd.f32 %v1630, %v1742
        %1744 = vdwg.mxu0
        %1745 = vmatprep.subr.bf16.mxu0 %v1247
        %1746 = vmatpush1.bf16.msra.mxu0 %v1246
        %1747 = vmatprep.subr.bf16.mxu0 %v1249
        %1748 = vmatpush1.bf16.msra.mxu0 %v1248
        %1749 = vmatprep.subr.bf16.mxu0 %v1251
        %1750 = vmatpush1.bf16.msra.mxu0 %v1250
        %1751 = vmatprep.subr.bf16.mxu0 %v1253
        %1752 = vmatpush1.bf16.msra.mxu0 %v1252
        %1753 = vmatprep.subr.bf16.mxu0 %v1255
        %1754 = vmatpush1.bf16.msra.mxu0 %v1254
        %1755 = vmatprep.subr.bf16.mxu0 %v1257
        %1756 = vmatpush1.bf16.msra.mxu0 %v1256
        %1757 = vmatprep.subr.bf16.mxu0 %v1259
        %1758 = vmatpush1.bf16.msra.mxu0 %v1258
        %1759 = vmatprep.subr.bf16.mxu0 %v1261
        %1760 = vmatpush1.bf16.msra.mxu0 %v1260
        %1761 = vmatprep.subr.bf16.mxu0 %v1263
        %1762 = vmatpush1.bf16.msra.mxu0 %v1262
        %1763 = vmatprep.subr.bf16.mxu0 %v1265
        %1764 = vmatpush1.bf16.msra.mxu0 %v1264
        %1765 = vmatprep.subr.bf16.mxu0 %v1267
        %1766 = vmatpush1.bf16.msra.mxu0 %v1266
        %1767 = vmatprep.subr.bf16.mxu0 %v1269
        %1768 = vmatpush1.bf16.msra.mxu0 %v1268
        %1769 = vmatprep.subr.bf16.mxu0 %v1271
        %1770 = vmatpush1.bf16.msra.mxu0 %v1270
        %1771 = vmatprep.subr.bf16.mxu0 %v1273
        %1772 = vmatpush1.bf16.msra.mxu0 %v1272
        %1773 = vmatprep.subr.bf16.mxu0 %v1275
        %1774 = vmatpush1.bf16.msra.mxu0 %v1274
        %1775 = vmatprep.subr.bf16.mxu0 %v1277
        %1776 = vmatpush1.bf16.msra.mxu0 %v1276
        %1777 = vmatprep.mubr.bf16.mxu0 %v645
        %1778 = vmatmul.mubr.bf16.gmra.mrb[0].mxu0 %v644
        %v1779 = vpop.f32.mrb[0].mxu0
        %v1780 = vadd.f32 %v1667, %v1779
        %v1781 = vpop.f32.mrb[0].mxu0
        %v1782 = vadd.f32 %v1669, %v1781
        %v1783 = vpop.f32.mrb[0].mxu0
        %v1784 = vadd.f32 %v1671, %v1783
        %v1785 = vpop.f32.mrb[0].mxu0
        %v1786 = vadd.f32 %v1673, %v1785
        %1787 = vmatprep.mubr.bf16.mxu0 %v653
        %1788 = vmatmul.mubr.bf16.gmra.mrb[0].mxu0 %v652
        %v1789 = vpop.f32.mrb[0].mxu0
        %v1790 = vadd.f32 %v1677, %v1789
        %v1791 = vpop.f32.mrb[0].mxu0
        %v1792 = vadd.f32 %v1679, %v1791
        %v1793 = vpop.f32.mrb[0].mxu0
        %v1794 = vadd.f32 %v1681, %v1793
        %v1795 = vpop.f32.mrb[0].mxu0
        %v1796 = vadd.f32 %v1683, %v1795
        %1797 = vmatprep.mubr.bf16.mxu0 %v661
        %1798 = vmatmul.mubr.bf16.gmra.mrb[0].mxu0 %v660
        %v1799 = vpop.f32.mrb[0].mxu0
        %v1800 = vadd.f32 %v1687, %v1799
        %v1801 = vpop.f32.mrb[0].mxu0
        %v1802 = vadd.f32 %v1689, %v1801
        %v1803 = vpop.f32.mrb[0].mxu0
        %v1804 = vadd.f32 %v1691, %v1803
        %v1805 = vpop.f32.mrb[0].mxu0
        %v1806 = vadd.f32 %v1693, %v1805
        %1807 = vmatprep.mubr.bf16.mxu0 %v669
        %1808 = vmatmul.mubr.bf16.gmra.mrb[0].mxu0 %v668
        %v1809 = vpop.f32.mrb[0].mxu0
        %v1810 = vadd.f32 %v1697, %v1809
        %v1811 = vpop.f32.mrb[0].mxu0
        %v1812 = vadd.f32 %v1699, %v1811
        %v1813 = vpop.f32.mrb[0].mxu0
        %v1814 = vadd.f32 %v1701, %v1813
        %v1815 = vpop.f32.mrb[0].mxu0
        %v1816 = vadd.f32 %v1703, %v1815
        %1817 = vmatprep.mubr.bf16.mxu0 %v677
        %1818 = vmatmul.mubr.bf16.gmra.mrb[0].mxu0 %v676
        %v1819 = vpop.f32.mrb[0].mxu0
        %v1820 = vadd.f32 %v1707, %v1819
        %v1821 = vpop.f32.mrb[0].mxu0
        %v1822 = vadd.f32 %v1709, %v1821
        %v1823 = vpop.f32.mrb[0].mxu0
        %v1824 = vadd.f32 %v1711, %v1823
        %v1825 = vpop.f32.mrb[0].mxu0
        %v1826 = vadd.f32 %v1713, %v1825
        %1827 = vmatprep.mubr.bf16.mxu0 %v685
        %1828 = vmatmul.mubr.bf16.gmra.mrb[0].mxu0 %v684
        %v1829 = vpop.f32.mrb[0].mxu0
        %v1830 = vadd.f32 %v1717, %v1829
        %v1831 = vpop.f32.mrb[0].mxu0
        %v1832 = vadd.f32 %v1719, %v1831
        %v1833 = vpop.f32.mrb[0].mxu0
        %v1834 = vadd.f32 %v1721, %v1833
        %v1835 = vpop.f32.mrb[0].mxu0
        %v1836 = vadd.f32 %v1723, %v1835
        %1837 = vmatprep.mubr.bf16.mxu0 %v693
        %1838 = vmatmul.mubr.bf16.gmra.mrb[0].mxu0 %v692
        %v1839 = vpop.f32.mrb[0].mxu0
        %v1840 = vadd.f32 %v1727, %v1839
        %v1841 = vpop.f32.mrb[0].mxu0
        %v1842 = vadd.f32 %v1729, %v1841
        %v1843 = vpop.f32.mrb[0].mxu0
        %v1844 = vadd.f32 %v1731, %v1843
        %v1845 = vpop.f32.mrb[0].mxu0
        %v1846 = vadd.f32 %v1733, %v1845
        %1847 = vmatprep.mubr.bf16.mxu0 %v701
        %1848 = vmatmul.mubr.bf16.gmra.mrb[0].mxu0 %v700
        %v1849 = vpop.f32.mrb[0].mxu0
        %v1850 = vadd.f32 %v1737, %v1849
        %v1851 = vpop.f32.mrb[0].mxu0
        %v1852 = vadd.f32 %v1739, %v1851
        %v1853 = vpop.f32.mrb[0].mxu0
        %v1854 = vadd.f32 %v1741, %v1853
        %v1855 = vpop.f32.mrb[0].mxu0
        %v1856 = vadd.f32 %v1743, %v1855
        %1857 = vdwg.mxu0
        %1858 = vst [vmem:[%s238] sm:$0xff] %v1780
        %1859 = vst [vmem:[%s238 + $0x8] sm:$0xff] %v1782
        %1860 = vst [vmem:[%s238 + $0x10] sm:$0xff] %v1784
        %1861 = vst [vmem:[%s238 + $0x18] sm:$0xff] %v1786
        %1862 = vst [vmem:[%s238 + $0x20] sm:$0xff] %v1790
        %1863 = vst [vmem:[%s238 + $0x28] sm:$0xff] %v1792
        %1864 = vst [vmem:[%s238 + $0x30] sm:$0xff] %v1794
        %1865 = vst [vmem:[%s238 + $0x38] sm:$0xff] %v1796
        %1866 = vst [vmem:[%s238 + $0x40] sm:$0xff] %v1800
        %1867 = vst [vmem:[%s238 + $0x48] sm:$0xff] %v1802
        %1868 = vst [vmem:[%s238 + $0x50] sm:$0xff] %v1804
        %1869 = vst [vmem:[%s238 + $0x58] sm:$0xff] %v1806
        %1870 = vst [vmem:[%s238 + $0x60] sm:$0xff] %v1810
        %1871 = vst [vmem:[%s238 + $0x68] sm:$0xff] %v1812
        %1872 = vst [vmem:[%s238 + $0x70] sm:$0xff] %v1814
        %1873 = vst [vmem:[%s238 + $0x78] sm:$0xff] %v1816
        %1874 = vst [vmem:[%s238 + $0x80] sm:$0xff] %v1820
        %1875 = vst [vmem:[%s238 + $0x88] sm:$0xff] %v1822
        %1876 = vst [vmem:[%s238 + $0x90] sm:$0xff] %v1824
        %1877 = vst [vmem:[%s238 + $0x98] sm:$0xff] %v1826
        %1878 = vst [vmem:[%s238 + $0xa0] sm:$0xff] %v1830
        %1879 = vst [vmem:[%s238 + $0xa8] sm:$0xff] %v1832
        %1880 = vst [vmem:[%s238 + $0xb0] sm:$0xff] %v1834
        %1881 = vst [vmem:[%s238 + $0xb8] sm:$0xff] %v1836
        %1882 = vst [vmem:[%s238 + $0xc0] sm:$0xff] %v1840
        %1883 = vst [vmem:[%s238 + $0xc8] sm:$0xff] %v1842
        %1884 = vst [vmem:[%s238 + $0xd0] sm:$0xff] %v1844
        %1885 = vst [vmem:[%s238 + $0xd8] sm:$0xff] %v1846
        %1886 = vst [vmem:[%s238 + $0xe0] sm:$0xff] %v1850
        %1887 = vst [vmem:[%s238 + $0xe8] sm:$0xff] %v1852
        %1888 = vst [vmem:[%s238 + $0xf0] sm:$0xff] %v1854
        %1889 = vst [vmem:[%s238 + $0xf8] sm:$0xff] %v1856
        %s1890 = sand.u32 %s102, 1
        %s1891 = scalar_lea.sflag [#allocation4], %s1890
        %s1892 = sand.u32 %s102, 1
        %s1893 = smul.addr %s1892, 256
        %s1894 = scalar_lea.vmem [#allocation8], %s1893
        // Predicated region
        $region45: #{linear_pallas.1} parent=31 // pred_check
          %p1895 = pneg %p112
        $region46: #{linear_pallas.1} parent=31 // pred_check_branch
          %1897 = sbr.rel (%p1895) target = $region48
        $region47: #{linear_pallas.1} parent=31 // pred_region
          %s1898 = smul.u32 2, %s21
          %s1900 = ssub.s32 4096, 4096
          %1901 = vsyncadd %s1891, %s1900
          %s1902 = smul.addr %s1898, 128
          %s1903 = scalar_lea.hbm %s3, %s1902
          %s1904 = sshll.u32 %s1894, 4
          %s1905 = int_to_ptr.vmem [resolvable:$true] %s1904
          %1910 = dma.vmem_to_hbm [thread:$0]  %s1905, 4096, %s1903, %s1891, 256, 1024, 16
        $region48: #{linear_pallas.1} parent=31 // pred_fallthru
          _
      $region32: #{linear_pallas.1} parent=5 // pred_fallthru
        _
      %p1911 = scmp.le.s32.totalorder 2, %s16
      // Predicated region
      $region49: #{linear_pallas.1} parent=5 // pred_check
        %p1912 = pneg %p1911
      $region50: #{linear_pallas.1} parent=5 // pred_check_branch
        %1914 = sbr.rel (%p1912) target = $region52
      $region51: #{linear_pallas.1} parent=5 // pred_region
        %s1915 = ssub.s32 %s16, 2
        // Predicated region
        $region53: #{linear_pallas.1} parent=51 // pred_check
          %p1916 = pneg %p118
        $region54: #{linear_pallas.1} parent=51 // pred_check_branch
          %1918 = sbr.rel (%p1916) target = $region56
        $region55: #{linear_pallas.1} parent=51 // pred_region
          %s1919 = sand.u32 %s103, 1
          %s1920 = scalar_lea.sflag [#allocation4], %s1919
          %s1921 = sand.u32 %s103, 1
          %s1922 = smul.addr %s1921, 256
          %s1923 = scalar_lea.vmem [#allocation8], %s1922
          %1924 = dma.done %s1920, 4096
        $region56: #{linear_pallas.1} parent=51 // pred_fallthru
          _
      $region52: #{linear_pallas.1} parent=5 // pred_fallthru
        _
    $region6: #{linear_pallas.1} parent=1 // loop_footer
      %s20 = sadd.s32 1, %s16
    $region7: #{linear_pallas.1} parent=1 // loop_footer_branch
      %15 = sbr.rel target = $region3
    $region8: #{linear_pallas.1} parent=1 // loop_exit
      _
    %1925 = vsyncpa [#allocation3], 1
    %s1926 = scalar_lea.sflag [#allocation3], 1
    %1927 = vsyncpa %s1926, 1
    %1928 = vsyncpa [#allocation6], 1
    %s1929 = scalar_lea.sflag [#allocation6], 1
    %1930 = vsyncpa %s1929, 1
    %1931 = vsyncpa [#allocation4], 1
    %s1932 = scalar_lea.sflag [#allocation4], 1
    %1933 = vsyncpa %s1932, 1

</llo_original>
